<compile_context>
chip_gen: v5e
topology: v5e:2x2
jax: 0.10.0
libtpu: 0.0.40
codegen_flags: <defaults>
</compile_context>

<pallas_src>
import functools

import jax
import jax.numpy as jnp
from jax import lax
from jax.experimental import pallas as pl
from jax.experimental.pallas import tpu as pltpu


def _round_up(x, m):
    return (x + m - 1) // m * m


# ----------------------------------------------------------------------------
# Fused Pallas kernel: all layers + all timesteps in one invocation.
# ----------------------------------------------------------------------------
def _make_encoder_kernel(n_layers, seq_len):
    """Build the fused Encoder kernel body for a fixed layer count / seq length."""

    def kernel(*refs):
        # Inputs
        x0_ref = refs[0]                                    # (S, B_pad, H_pad) f32: layer-0 input projections
        idx = 1
        w_hh_refs = refs[idx:idx + n_layers]                # bf16 (H_pad, H_pad), W_hh^T per layer
        idx += n_layers
        w_ih_refs = refs[idx:idx + n_layers - 1]            # bf16 (H_pad, H_pad), W_ih^T, layers 1..L-1
        idx += n_layers - 1
        b_refs = refs[idx:idx + n_layers - 1]               # f32 (1, H_pad), b_ih+b_hh, layers 1..L-1
        idx += n_layers - 1
        # Output
        hid_ref = refs[idx]                                 # (n_layers, B_pad, H_pad) f32
        # Scratch
        act_ref = refs[idx + 1]                             # (S, B_pad, H_pad) f32: prev layer's outputs
        xproj_ref = refs[idx + 2]                           # (S, B_pad, H_pad) f32: current layer's input proj
        h_ref = refs[idx + 3]                               # (B_pad, H_pad)    f32: carried hidden state

        s_total, b_pad, h_pad = x0_ref.shape

        for l in range(n_layers):
            is_last = (l == n_layers - 1)

            if l == 0:
                # Layer-0 projections (embedding + bias folded) come from the wrapper.
                xp_ref = x0_ref
            else:
                # Hoisted input projection: one (S*B_pad, H_pad) @ (H_pad, H_pad)
                # matmul for all timesteps (MXU gets S*B rows instead of B).
                acts = act_ref[...].reshape(s_total * b_pad, h_pad)
                proj = jnp.dot(acts.astype(jnp.bfloat16), w_ih_refs[l - 1][...],
                               preferred_element_type=jnp.float32)
                proj = proj + b_refs[l - 1][...]            # bias broadcast, off critical path
                xproj_ref[...] = proj.reshape(s_total, b_pad, h_pad)
                xp_ref = xproj_ref

            w_hh_ref = w_hh_refs[l]

            # t = 0 peeled: h_0 == 0 (PyTorch default), so h_1 = tanh(x_proj[0]).
            h0 = jnp.tanh(xp_ref[0])
            h_ref[...] = h0
            if not is_last:
                act_ref[0] = h0

            def step(t, carry, xp_ref=xp_ref, w_hh_ref=w_hh_ref, is_last=is_last):
                h_prev = h_ref[...]                          # (B_pad, H_pad) f32
                rec = jnp.dot(h_prev.astype(jnp.bfloat16), w_hh_ref[...],
                              preferred_element_type=jnp.float32)
                h_new = jnp.tanh(xp_ref[t] + rec)            # f32 add + EUP tanh
                h_ref[...] = h_new
                if not is_last:
                    # Feed layer l+1; safe in-place overwrite (time loop is serial,
                    # and layer l's projections were already hoisted to xproj_ref).
                    act_ref[t] = h_new
                # Last layer: per-step outputs are discarded by the encoder.
                return carry

            # Full unroll for short sequences (LLO scheduler visibility);
            # partial unroll amortizes loop overhead for longer ones.
            lax.fori_loop(1, seq_len, step, 0,
                          unroll=True if seq_len <= 16 else 8)

            # Final hidden of this layer -- written once, not every timestep.
            hid_ref[l] = h_ref[...]

    return kernel


# ----------------------------------------------------------------------------
# Parameter init (matches nn.Embedding + nn.RNN parameterization).
# ----------------------------------------------------------------------------
def init_encoder_params(key, input_dim, emb_dim, hid_dim, n_layers):
    params = {}
    k_emb, key = jax.random.split(key)
    params["embedding"] = jax.random.normal(
        k_emb, (input_dim, emb_dim), jnp.float32)            # nn.Embedding weight
    bound = 1.0 / jnp.sqrt(hid_dim)
    for l in range(n_layers):
        d_in = emb_dim if l == 0 else hid_dim
        k1, k2, k3, k4, key = jax.random.split(key, 5)
        params[f"w_ih_l{l}"] = jax.random.uniform(
            k1, (hid_dim, d_in), jnp.float32, -bound, bound)
        params[f"w_hh_l{l}"] = jax.random.uniform(
            k2, (hid_dim, hid_dim), jnp.float32, -bound, bound)
        params[f"b_ih_l{l}"] = jax.random.uniform(
            k3, (hid_dim,), jnp.float32, -bound, bound)
        params[f"b_hh_l{l}"] = jax.random.uniform(
            k4, (hid_dim,), jnp.float32, -bound, bound)
    return params


# ----------------------------------------------------------------------------
# Encoder forward: glue (embedding fold, weight padding) + one fused kernel.
# ----------------------------------------------------------------------------
@functools.partial(jax.jit, static_argnames=("n_layers",))
def encoder_forward(params, src, n_layers):
    """src: (S, B) int32 token ids -> hidden: (n_layers, B, hid_dim) f32."""
    emb = params["embedding"].astype(jnp.float32)             # (V, E)
    H = params["w_hh_l0"].shape[0]
    S, B = src.shape

    B_pad = _round_up(max(B, 8), 8)
    H_pad = _round_up(H, 128)

    # --- Fold embedding (+ eval-mode dropout = identity) into layer 0's input
    # projection: table0[v] = emb[v] @ W_ih0^T + (b_ih0 + b_hh0).  The gather
    # then yields layer 0's per-step projections directly -> no E-wide
    # activations in VMEM and no layer-0 input matmul in the kernel.
    w_ih0 = params["w_ih_l0"].astype(jnp.float32)              # (H, E)
    b0 = (params["b_ih_l0"] + params["b_hh_l0"]).astype(jnp.float32)
    table0 = emb @ w_ih0.T + b0                                # (V, H)
    table0 = jnp.pad(table0, ((0, 0), (0, H_pad - H)))         # zero-padded H lanes
    x0 = jnp.take(table0, src, axis=0)                         # (S, B, H_pad)
    x0 = jnp.pad(x0, ((0, 0), (0, B_pad - B), (0, 0)))         # (S, B_pad, H_pad)

    # --- Per-layer recurrent / input weights, transposed, zero-padded, bf16.
    w_hh_list, w_ih_list, b_list = [], [], []
    for l in range(n_layers):
        w_hh = params[f"w_hh_l{l}"].astype(jnp.float32)        # (H, H)
        w_hh_t = jnp.pad(w_hh.T, ((0, H_pad - H), (0, H_pad - H)))
        w_hh_list.append(w_hh_t.astype(jnp.bfloat16))
        if l > 0:
            w_ih = params[f"w_ih_l{l}"].astype(jnp.float32)    # (H, H)
            w_ih_t = jnp.pad(w_ih.T, ((0, H_pad - H), (0, H_pad - H)))
            w_ih_list.append(w_ih_t.astype(jnp.bfloat16))
            b = (params[f"b_ih_l{l}"] + params[f"b_hh_l{l}"]).astype(jnp.float32)
            b_list.append(jnp.pad(b, (0, H_pad - H)).reshape(1, H_pad))

    kernel = _make_encoder_kernel(n_layers, S)

    in_specs = [pl.BlockSpec((S, B_pad, H_pad), lambda i: (0, 0, 0))]
    in_specs += [pl.BlockSpec((H_pad, H_pad), lambda i: (0, 0)) for _ in w_hh_list]
    in_specs += [pl.BlockSpec((H_pad, H_pad), lambda i: (0, 0)) for _ in w_ih_list]
    in_specs += [pl.BlockSpec((1, H_pad), lambda i: (0, 0)) for _ in b_list]

    scratch_shapes = [
        pltpu.VMEM((S, B_pad, H_pad), jnp.float32),   # inter-layer activations
        pltpu.VMEM((S, B_pad, H_pad), jnp.float32),   # hoisted input projections
        pltpu.VMEM((B_pad, H_pad), jnp.float32),      # carried h_t
    ]

    # Explicit VMEM budget: 2x (double-buffered) inputs + outputs, scratch, margin.
    in_bytes = (x0.size * x0.dtype.itemsize
                + sum(w.size * w.dtype.itemsize for w in w_hh_list + w_ih_list)
                + sum(b.size * b.dtype.itemsize for b in b_list))
    out_bytes = n_layers * B_pad * H_pad * 4
    scratch_bytes = (2 * S * B_pad * H_pad + B_pad * H_pad) * 4
    vmem_limit = 2 * (in_bytes + out_bytes) + scratch_bytes + (4 << 20)
    vmem_limit = int(min(64 << 20, max(16 << 20, vmem_limit)))

    hidden_p = pl.pallas_call(
        kernel,
        out_shape=jax.ShapeDtypeStruct((n_layers, B_pad, H_pad), jnp.float32),
        grid_spec=pltpu.PrefetchScalarGridSpec(
            num_scalar_prefetch=0,
            grid=(1,),                                        # single fused step
            in_specs=in_specs,
            out_specs=pl.BlockSpec((n_layers, B_pad, H_pad), lambda i: (0, 0, 0)),
            scratch_shapes=scratch_shapes),
        compiler_params=pltpu.CompilerParams(
            dimension_semantics=("arbitrary",),
            vmem_limit_bytes=vmem_limit),
    )(x0, *w_hh_list, *w_ih_list, *b_list)

    # Strip batch / hidden padding.
    return hidden_p[:, :B, :H]


# ----------------------------------------------------------------------------
# Pure-JAX f32 reference (mirrors nn.RNN eval-mode math) for a sanity check.
# ----------------------------------------------------------------------------
def encoder_reference(params, src, n_layers):
    S, B = src.shape
    H = params["w_hh_l0"].shape[0]
    x = params["embedding"][src]                              # (S, B, E)
    hiddens = []
    for l in range(n_layers):
        w_ih = params[f"w_ih_l{l}"]
        w_hh = params[f"w_hh_l{l}"]
        b = params[f"b_ih_l{l}"] + params[f"b_hh_l{l}"]
        h = jnp.zeros((B, H), jnp.float32)
        outs = []
        for t in range(S):
            h = jnp.tanh(x[t] @ w_ih.T + h @ w_hh.T + b)
            outs.append(h)
        x = jnp.stack(outs, axis=0)
        hiddens.append(h)
    return jnp.stack(hiddens, axis=0)


if __name__ == "__main__":
    # Small shapes consistent with the module.
    INPUT_DIM = 16    # vocab size
    EMB_DIM = 32
    HID_DIM = 32
    N_LAYERS = 2
    SEQ_LEN = 8
    BATCH = 2

    key = jax.random.PRNGKey(0)
    k_params, k_src = jax.random.split(key)

    params = init_encoder_params(k_params, INPUT_DIM, EMB_DIM, HID_DIM, N_LAYERS)
    src = jax.random.randint(k_src, (SEQ_LEN, BATCH), 0, INPUT_DIM, jnp.int32)

    hidden = encoder_forward(params, src, N_LAYERS)
    hidden = jax.block_until_ready(hidden)

    assert hidden.shape == (N_LAYERS, BATCH, HID_DIM), hidden.shape
    assert bool(jnp.all(jnp.isfinite(hidden)))

    # bf16 weights / f32 accumulation: allow small drift vs the f32 reference.
    ref = encoder_reference(params, src, N_LAYERS)
    max_err = float(jnp.max(jnp.abs(hidden - ref)))
    assert max_err < 5e-2, f"max abs err vs f32 reference: {max_err}"

    print("KERNEL_OK")
</pallas_src>

<mosaic_0001>
module attributes {stable_mosaic.version = 11 : i64} {
  func.func @kernel(%arg0: i32, %arg1: memref<8x8x128xf32, #tpu.memory_space<vmem>>, %arg2: memref<128x128xbf16, #tpu.memory_space<vmem>>, %arg3: memref<128x128xbf16, #tpu.memory_space<vmem>>, %arg4: memref<128x128xbf16, #tpu.memory_space<vmem>>, %arg5: memref<1x128xf32, #tpu.memory_space<vmem>>, %arg6: memref<2x8x128xf32, #tpu.memory_space<vmem>>, %arg7: memref<8x8x128xf32, #tpu.memory_space<vmem>>, %arg8: memref<8x8x128xf32, #tpu.memory_space<vmem>>, %arg9: memref<8x128xf32, #tpu.memory_space<vmem>>) attributes {dimension_semantics = [#tpu.dimension_semantics<arbitrary>], iteration_bounds = array<i64: 1>, scalar_prefetch = 0 : i64, scratch_operands = 3 : i64, tpu.core_type = #tpu.core_type<tc>, window_params = [{pipeline_mode = #tpu.pipeline_mode<synchronous>, transform_indices = @transform_0, window_bounds = array<i64: 8, 8, 128>}, {pipeline_mode = #tpu.pipeline_mode<synchronous>, transform_indices = @transform_1, window_bounds = array<i64: 128, 128>}, {pipeline_mode = #tpu.pipeline_mode<synchronous>, transform_indices = @transform_2, window_bounds = array<i64: 128, 128>}, {pipeline_mode = #tpu.pipeline_mode<synchronous>, transform_indices = @transform_3, window_bounds = array<i64: 128, 128>}, {pipeline_mode = #tpu.pipeline_mode<synchronous>, transform_indices = @transform_4, window_bounds = array<i64: 1, 128>}, {pipeline_mode = #tpu.pipeline_mode<synchronous>, transform_indices = @transform_5, window_bounds = array<i64: 2, 8, 128>}]} {
    %c0 = arith.constant 0 : index
    %c0_0 = arith.constant 0 : index
    %c0_1 = arith.constant 0 : index
    %0 = vector.load %arg1[%c0, %c0_0, %c0_1] : memref<8x8x128xf32, #tpu.memory_space<vmem>>, vector<1x8x128xf32>
    %1 = vector.shape_cast %0 : vector<1x8x128xf32> to vector<8x128xf32>
    %2 = math.tanh %1 : vector<8x128xf32>
    %c0_2 = arith.constant 0 : index
    %c0_3 = arith.constant 0 : index
    %3 = vector.load %arg9[%c0_2, %c0_3] : memref<8x128xf32, #tpu.memory_space<vmem>>, vector<8x128xf32>
    tpu.vector_store %arg9[%c0_2, %c0_3], %2 {strides = array<i32>} : memref<8x128xf32, #tpu.memory_space<vmem>>, vector<8x128xf32>,
    %c0_4 = arith.constant 0 : index
    %c0_5 = arith.constant 0 : index
    %c0_6 = arith.constant 0 : index
    %4 = vector.load %arg7[%c0_4, %c0_5, %c0_6] : memref<8x8x128xf32, #tpu.memory_space<vmem>>, vector<1x8x128xf32>
    %5 = vector.shape_cast %4 : vector<1x8x128xf32> to vector<8x128xf32>
    %6 = vector.shape_cast %2 : vector<8x128xf32> to vector<1x8x128xf32>
    tpu.vector_store %arg7[%c0_4, %c0_5, %c0_6], %6 {strides = array<i32>} : memref<8x8x128xf32, #tpu.memory_space<vmem>>, vector<1x8x128xf32>,
    %c1_i32 = arith.constant 1 : i32
    %c0_7 = arith.constant 0 : index
    %c0_8 = arith.constant 0 : index
    %7 = vector.load %arg9[%c0_7, %c0_8] : memref<8x128xf32, #tpu.memory_space<vmem>>, vector<8x128xf32>
    %8 = arith.truncf %7 : vector<8x128xf32> to vector<8x128xbf16>
    %c0_9 = arith.constant 0 : index
    %c0_10 = arith.constant 0 : index
    %9 = vector.load %arg2[%c0_9, %c0_10] : memref<128x128xbf16, #tpu.memory_space<vmem>>, vector<128x128xbf16>
    %cst = arith.constant dense<0.000000e+00> : vector<8x128xf32>
    %10 = tpu.matmul %8, %9, %cst {dimension_numbers = #tpu.dot_dimension_numbers<[1], [0], [0], [1], [0, 0, 1, 1], [], []>} : vector<8x128xbf16>, vector<128x128xbf16>, vector<8x128xf32> -> vector<8x128xf32>
    %11 = arith.index_cast %c1_i32 : i32 to index
    %c0_11 = arith.constant 0 : index
    %c0_12 = arith.constant 0 : index
    %12 = vector.load %arg1[%11, %c0_11, %c0_12] : memref<8x8x128xf32, #tpu.memory_space<vmem>>, vector<1x8x128xf32>
    %13 = vector.shape_cast %12 : vector<1x8x128xf32> to vector<8x128xf32>
    %14 = arith.addf %13, %10 : vector<8x128xf32>
    %15 = math.tanh %14 : vector<8x128xf32>
    %c0_13 = arith.constant 0 : index
    %c0_14 = arith.constant 0 : index
    %16 = vector.load %arg9[%c0_13, %c0_14] : memref<8x128xf32, #tpu.memory_space<vmem>>, vector<8x128xf32>
    tpu.vector_store %arg9[%c0_13, %c0_14], %15 {strides = array<i32>} : memref<8x128xf32, #tpu.memory_space<vmem>>, vector<8x128xf32>,
    %17 = arith.index_cast %c1_i32 : i32 to index
    %c0_15 = arith.constant 0 : index
    %c0_16 = arith.constant 0 : index
    %18 = vector.load %arg7[%17, %c0_15, %c0_16] : memref<8x8x128xf32, #tpu.memory_space<vmem>>, vector<1x8x128xf32>
    %19 = vector.shape_cast %18 : vector<1x8x128xf32> to vector<8x128xf32>
    %20 = vector.shape_cast %15 : vector<8x128xf32> to vector<1x8x128xf32>
    tpu.vector_store %arg7[%17, %c0_15, %c0_16], %20 {strides = array<i32>} : memref<8x8x128xf32, #tpu.memory_space<vmem>>, vector<1x8x128xf32>,
    %c2_i32 = arith.constant 2 : i32
    %c0_17 = arith.constant 0 : index
    %c0_18 = arith.constant 0 : index
    %21 = vector.load %arg9[%c0_17, %c0_18] : memref<8x128xf32, #tpu.memory_space<vmem>>, vector<8x128xf32>
    %22 = arith.truncf %21 : vector<8x128xf32> to vector<8x128xbf16>
    %c0_19 = arith.constant 0 : index
    %c0_20 = arith.constant 0 : index
    %23 = vector.load %arg2[%c0_19, %c0_20] : memref<128x128xbf16, #tpu.memory_space<vmem>>, vector<128x128xbf16>
    %cst_21 = arith.constant dense<0.000000e+00> : vector<8x128xf32>
    %24 = tpu.matmul %22, %23, %cst_21 {dimension_numbers = #tpu.dot_dimension_numbers<[1], [0], [0], [1], [0, 0, 1, 1], [], []>} : vector<8x128xbf16>, vector<128x128xbf16>, vector<8x128xf32> -> vector<8x128xf32>
    %25 = arith.index_cast %c2_i32 : i32 to index
    %c0_22 = arith.constant 0 : index
    %c0_23 = arith.constant 0 : index
    %26 = vector.load %arg1[%25, %c0_22, %c0_23] : memref<8x8x128xf32, #tpu.memory_space<vmem>>, vector<1x8x128xf32>
    %27 = vector.shape_cast %26 : vector<1x8x128xf32> to vector<8x128xf32>
    %28 = arith.addf %27, %24 : vector<8x128xf32>
    %29 = math.tanh %28 : vector<8x128xf32>
    %c0_24 = arith.constant 0 : index
    %c0_25 = arith.constant 0 : index
    %30 = vector.load %arg9[%c0_24, %c0_25] : memref<8x128xf32, #tpu.memory_space<vmem>>, vector<8x128xf32>
    tpu.vector_store %arg9[%c0_24, %c0_25], %29 {strides = array<i32>} : memref<8x128xf32, #tpu.memory_space<vmem>>, vector<8x128xf32>,
    %31 = arith.index_cast %c2_i32 : i32 to index
    %c0_26 = arith.constant 0 : index
    %c0_27 = arith.constant 0 : index
    %32 = vector.load %arg7[%31, %c0_26, %c0_27] : memref<8x8x128xf32, #tpu.memory_space<vmem>>, vector<1x8x128xf32>
    %33 = vector.shape_cast %32 : vector<1x8x128xf32> to vector<8x128xf32>
    %34 = vector.shape_cast %29 : vector<8x128xf32> to vector<1x8x128xf32>
    tpu.vector_store %arg7[%31, %c0_26, %c0_27], %34 {strides = array<i32>} : memref<8x8x128xf32, #tpu.memory_space<vmem>>, vector<1x8x128xf32>,
    %c3_i32 = arith.constant 3 : i32
    %c0_28 = arith.constant 0 : index
    %c0_29 = arith.constant 0 : index
    %35 = vector.load %arg9[%c0_28, %c0_29] : memref<8x128xf32, #tpu.memory_space<vmem>>, vector<8x128xf32>
    %36 = arith.truncf %35 : vector<8x128xf32> to vector<8x128xbf16>
    %c0_30 = arith.constant 0 : index
    %c0_31 = arith.constant 0 : index
    %37 = vector.load %arg2[%c0_30, %c0_31] : memref<128x128xbf16, #tpu.memory_space<vmem>>, vector<128x128xbf16>
    %cst_32 = arith.constant dense<0.000000e+00> : vector<8x128xf32>
    %38 = tpu.matmul %36, %37, %cst_32 {dimension_numbers = #tpu.dot_dimension_numbers<[1], [0], [0], [1], [0, 0, 1, 1], [], []>} : vector<8x128xbf16>, vector<128x128xbf16>, vector<8x128xf32> -> vector<8x128xf32>
    %39 = arith.index_cast %c3_i32 : i32 to index
    %c0_33 = arith.constant 0 : index
    %c0_34 = arith.constant 0 : index
    %40 = vector.load %arg1[%39, %c0_33, %c0_34] : memref<8x8x128xf32, #tpu.memory_space<vmem>>, vector<1x8x128xf32>
    %41 = vector.shape_cast %40 : vector<1x8x128xf32> to vector<8x128xf32>
    %42 = arith.addf %41, %38 : vector<8x128xf32>
    %43 = math.tanh %42 : vector<8x128xf32>
    %c0_35 = arith.constant 0 : index
    %c0_36 = arith.constant 0 : index
    %44 = vector.load %arg9[%c0_35, %c0_36] : memref<8x128xf32, #tpu.memory_space<vmem>>, vector<8x128xf32>
    tpu.vector_store %arg9[%c0_35, %c0_36], %43 {strides = array<i32>} : memref<8x128xf32, #tpu.memory_space<vmem>>, vector<8x128xf32>,
    %45 = arith.index_cast %c3_i32 : i32 to index
    %c0_37 = arith.constant 0 : index
    %c0_38 = arith.constant 0 : index
    %46 = vector.load %arg7[%45, %c0_37, %c0_38] : memref<8x8x128xf32, #tpu.memory_space<vmem>>, vector<1x8x128xf32>
    %47 = vector.shape_cast %46 : vector<1x8x128xf32> to vector<8x128xf32>
    %48 = vector.shape_cast %43 : vector<8x128xf32> to vector<1x8x128xf32>
    tpu.vector_store %arg7[%45, %c0_37, %c0_38], %48 {strides = array<i32>} : memref<8x8x128xf32, #tpu.memory_space<vmem>>, vector<1x8x128xf32>,
    %c4_i32 = arith.constant 4 : i32
    %c0_39 = arith.constant 0 : index
    %c0_40 = arith.constant 0 : index
    %49 = vector.load %arg9[%c0_39, %c0_40] : memref<8x128xf32, #tpu.memory_space<vmem>>, vector<8x128xf32>
    %50 = arith.truncf %49 : vector<8x128xf32> to vector<8x128xbf16>
    %c0_41 = arith.constant 0 : index
    %c0_42 = arith.constant 0 : index
    %51 = vector.load %arg2[%c0_41, %c0_42] : memref<128x128xbf16, #tpu.memory_space<vmem>>, vector<128x128xbf16>
    %cst_43 = arith.constant dense<0.000000e+00> : vector<8x128xf32>
    %52 = tpu.matmul %50, %51, %cst_43 {dimension_numbers = #tpu.dot_dimension_numbers<[1], [0], [0], [1], [0, 0, 1, 1], [], []>} : vector<8x128xbf16>, vector<128x128xbf16>, vector<8x128xf32> -> vector<8x128xf32>
    %53 = arith.index_cast %c4_i32 : i32 to index
    %c0_44 = arith.constant 0 : index
    %c0_45 = arith.constant 0 : index
    %54 = vector.load %arg1[%53, %c0_44, %c0_45] : memref<8x8x128xf32, #tpu.memory_space<vmem>>, vector<1x8x128xf32>
    %55 = vector.shape_cast %54 : vector<1x8x128xf32> to vector<8x128xf32>
    %56 = arith.addf %55, %52 : vector<8x128xf32>
    %57 = math.tanh %56 : vector<8x128xf32>
    %c0_46 = arith.constant 0 : index
    %c0_47 = arith.constant 0 : index
    %58 = vector.load %arg9[%c0_46, %c0_47] : memref<8x128xf32, #tpu.memory_space<vmem>>, vector<8x128xf32>
    tpu.vector_store %arg9[%c0_46, %c0_47], %57 {strides = array<i32>} : memref<8x128xf32, #tpu.memory_space<vmem>>, vector<8x128xf32>,
    %59 = arith.index_cast %c4_i32 : i32 to index
    %c0_48 = arith.constant 0 : index
    %c0_49 = arith.constant 0 : index
    %60 = vector.load %arg7[%59, %c0_48, %c0_49] : memref<8x8x128xf32, #tpu.memory_space<vmem>>, vector<1x8x128xf32>
    %61 = vector.shape_cast %60 : vector<1x8x128xf32> to vector<8x128xf32>
    %62 = vector.shape_cast %57 : vector<8x128xf32> to vector<1x8x128xf32>
    tpu.vector_store %arg7[%59, %c0_48, %c0_49], %62 {strides = array<i32>} : memref<8x8x128xf32, #tpu.memory_space<vmem>>, vector<1x8x128xf32>,
    %c5_i32 = arith.constant 5 : i32
    %c0_50 = arith.constant 0 : index
    %c0_51 = arith.constant 0 : index
    %63 = vector.load %arg9[%c0_50, %c0_51] : memref<8x128xf32, #tpu.memory_space<vmem>>, vector<8x128xf32>
    %64 = arith.truncf %63 : vector<8x128xf32> to vector<8x128xbf16>
    %c0_52 = arith.constant 0 : index
    %c0_53 = arith.constant 0 : index
    %65 = vector.load %arg2[%c0_52, %c0_53] : memref<128x128xbf16, #tpu.memory_space<vmem>>, vector<128x128xbf16>
    %cst_54 = arith.constant dense<0.000000e+00> : vector<8x128xf32>
    %66 = tpu.matmul %64, %65, %cst_54 {dimension_numbers = #tpu.dot_dimension_numbers<[1], [0], [0], [1], [0, 0, 1, 1], [], []>} : vector<8x128xbf16>, vector<128x128xbf16>, vector<8x128xf32> -> vector<8x128xf32>
    %67 = arith.index_cast %c5_i32 : i32 to index
    %c0_55 = arith.constant 0 : index
    %c0_56 = arith.constant 0 : index
    %68 = vector.load %arg1[%67, %c0_55, %c0_56] : memref<8x8x128xf32, #tpu.memory_space<vmem>>, vector<1x8x128xf32>
    %69 = vector.shape_cast %68 : vector<1x8x128xf32> to vector<8x128xf32>
    %70 = arith.addf %69, %66 : vector<8x128xf32>
    %71 = math.tanh %70 : vector<8x128xf32>
    %c0_57 = arith.constant 0 : index
    %c0_58 = arith.constant 0 : index
    %72 = vector.load %arg9[%c0_57, %c0_58] : memref<8x128xf32, #tpu.memory_space<vmem>>, vector<8x128xf32>
    tpu.vector_store %arg9[%c0_57, %c0_58], %71 {strides = array<i32>} : memref<8x128xf32, #tpu.memory_space<vmem>>, vector<8x128xf32>,
    %73 = arith.index_cast %c5_i32 : i32 to index
    %c0_59 = arith.constant 0 : index
    %c0_60 = arith.constant 0 : index
    %74 = vector.load %arg7[%73, %c0_59, %c0_60] : memref<8x8x128xf32, #tpu.memory_space<vmem>>, vector<1x8x128xf32>
    %75 = vector.shape_cast %74 : vector<1x8x128xf32> to vector<8x128xf32>
    %76 = vector.shape_cast %71 : vector<8x128xf32> to vector<1x8x128xf32>
    tpu.vector_store %arg7[%73, %c0_59, %c0_60], %76 {strides = array<i32>} : memref<8x8x128xf32, #tpu.memory_space<vmem>>, vector<1x8x128xf32>,
    %c6_i32 = arith.constant 6 : i32
    %c0_61 = arith.constant 0 : index
    %c0_62 = arith.constant 0 : index
    %77 = vector.load %arg9[%c0_61, %c0_62] : memref<8x128xf32, #tpu.memory_space<vmem>>, vector<8x128xf32>
    %78 = arith.truncf %77 : vector<8x128xf32> to vector<8x128xbf16>
    %c0_63 = arith.constant 0 : index
    %c0_64 = arith.constant 0 : index
    %79 = vector.load %arg2[%c0_63, %c0_64] : memref<128x128xbf16, #tpu.memory_space<vmem>>, vector<128x128xbf16>
    %cst_65 = arith.constant dense<0.000000e+00> : vector<8x128xf32>
    %80 = tpu.matmul %78, %79, %cst_65 {dimension_numbers = #tpu.dot_dimension_numbers<[1], [0], [0], [1], [0, 0, 1, 1], [], []>} : vector<8x128xbf16>, vector<128x128xbf16>, vector<8x128xf32> -> vector<8x128xf32>
    %81 = arith.index_cast %c6_i32 : i32 to index
    %c0_66 = arith.constant 0 : index
    %c0_67 = arith.constant 0 : index
    %82 = vector.load %arg1[%81, %c0_66, %c0_67] : memref<8x8x128xf32, #tpu.memory_space<vmem>>, vector<1x8x128xf32>
    %83 = vector.shape_cast %82 : vector<1x8x128xf32> to vector<8x128xf32>
    %84 = arith.addf %83, %80 : vector<8x128xf32>
    %85 = math.tanh %84 : vector<8x128xf32>
    %c0_68 = arith.constant 0 : index
    %c0_69 = arith.constant 0 : index
    %86 = vector.load %arg9[%c0_68, %c0_69] : memref<8x128xf32, #tpu.memory_space<vmem>>, vector<8x128xf32>
    tpu.vector_store %arg9[%c0_68, %c0_69], %85 {strides = array<i32>} : memref<8x128xf32, #tpu.memory_space<vmem>>, vector<8x128xf32>,
    %87 = arith.index_cast %c6_i32 : i32 to index
    %c0_70 = arith.constant 0 : index
    %c0_71 = arith.constant 0 : index
    %88 = vector.load %arg7[%87, %c0_70, %c0_71] : memref<8x8x128xf32, #tpu.memory_space<vmem>>, vector<1x8x128xf32>
    %89 = vector.shape_cast %88 : vector<1x8x128xf32> to vector<8x128xf32>
    %90 = vector.shape_cast %85 : vector<8x128xf32> to vector<1x8x128xf32>
    tpu.vector_store %arg7[%87, %c0_70, %c0_71], %90 {strides = array<i32>} : memref<8x8x128xf32, #tpu.memory_space<vmem>>, vector<1x8x128xf32>,
    %c7_i32 = arith.constant 7 : i32
    %c0_72 = arith.constant 0 : index
    %c0_73 = arith.constant 0 : index
    %91 = vector.load %arg9[%c0_72, %c0_73] : memref<8x128xf32, #tpu.memory_space<vmem>>, vector<8x128xf32>
    %92 = arith.truncf %91 : vector<8x128xf32> to vector<8x128xbf16>
    %c0_74 = arith.constant 0 : index
    %c0_75 = arith.constant 0 : index
    %93 = vector.load %arg2[%c0_74, %c0_75] : memref<128x128xbf16, #tpu.memory_space<vmem>>, vector<128x128xbf16>
    %cst_76 = arith.constant dense<0.000000e+00> : vector<8x128xf32>
    %94 = tpu.matmul %92, %93, %cst_76 {dimension_numbers = #tpu.dot_dimension_numbers<[1], [0], [0], [1], [0, 0, 1, 1], [], []>} : vector<8x128xbf16>, vector<128x128xbf16>, vector<8x128xf32> -> vector<8x128xf32>
    %95 = arith.index_cast %c7_i32 : i32 to index
    %c0_77 = arith.constant 0 : index
    %c0_78 = arith.constant 0 : index
    %96 = vector.load %arg1[%95, %c0_77, %c0_78] : memref<8x8x128xf32, #tpu.memory_space<vmem>>, vector<1x8x128xf32>
    %97 = vector.shape_cast %96 : vector<1x8x128xf32> to vector<8x128xf32>
    %98 = arith.addf %97, %94 : vector<8x128xf32>
    %99 = math.tanh %98 : vector<8x128xf32>
    %c0_79 = arith.constant 0 : index
    %c0_80 = arith.constant 0 : index
    %100 = vector.load %arg9[%c0_79, %c0_80] : memref<8x128xf32, #tpu.memory_space<vmem>>, vector<8x128xf32>
    tpu.vector_store %arg9[%c0_79, %c0_80], %99 {strides = array<i32>} : memref<8x128xf32, #tpu.memory_space<vmem>>, vector<8x128xf32>,
    %101 = arith.index_cast %c7_i32 : i32 to index
    %c0_81 = arith.constant 0 : index
    %c0_82 = arith.constant 0 : index
    %102 = vector.load %arg7[%101, %c0_81, %c0_82] : memref<8x8x128xf32, #tpu.memory_space<vmem>>, vector<1x8x128xf32>
    %103 = vector.shape_cast %102 : vector<1x8x128xf32> to vector<8x128xf32>
    %104 = vector.shape_cast %99 : vector<8x128xf32> to vector<1x8x128xf32>
    tpu.vector_store %arg7[%101, %c0_81, %c0_82], %104 {strides = array<i32>} : memref<8x8x128xf32, #tpu.memory_space<vmem>>, vector<1x8x128xf32>,
    %c7_i32_83 = arith.constant 7 : i32
    %c0_84 = arith.constant 0 : index
    %c0_85 = arith.constant 0 : index
    %105 = vector.load %arg9[%c0_84, %c0_85] : memref<8x128xf32, #tpu.memory_space<vmem>>, vector<8x128xf32>
    %c0_86 = arith.constant 0 : index
    %c0_87 = arith.constant 0 : index
    %c0_88 = arith.constant 0 : index
    %106 = vector.load %arg6[%c0_86, %c0_87, %c0_88] : memref<2x8x128xf32, #tpu.memory_space<vmem>>, vector<1x8x128xf32>
    %107 = vector.shape_cast %106 : vector<1x8x128xf32> to vector<8x128xf32>
    %108 = vector.shape_cast %105 : vector<8x128xf32> to vector<1x8x128xf32>
    tpu.vector_store %arg6[%c0_86, %c0_87, %c0_88], %108 {strides = array<i32>} : memref<2x8x128xf32, #tpu.memory_space<vmem>>, vector<1x8x128xf32>,
    %c0_89 = arith.constant 0 : index
    %c0_90 = arith.constant 0 : index
    %c0_91 = arith.constant 0 : index
    %109 = vector.load %arg7[%c0_89, %c0_90, %c0_91] : memref<8x8x128xf32, #tpu.memory_space<vmem>>, vector<8x8x128xf32>
    %110 = vector.shape_cast %109 : vector<8x8x128xf32> to vector<64x128xf32>
    %111 = arith.truncf %110 : vector<64x128xf32> to vector<64x128xbf16>
    %c0_92 = arith.constant 0 : index
    %c0_93 = arith.constant 0 : index
    %112 = vector.load %arg4[%c0_92, %c0_93] : memref<128x128xbf16, #tpu.memory_space<vmem>>, vector<128x128xbf16>
    %cst_94 = arith.constant dense<0.000000e+00> : vector<64x128xf32>
    %113 = tpu.matmul %111, %112, %cst_94 {dimension_numbers = #tpu.dot_dimension_numbers<[1], [0], [0], [1], [0, 0, 1, 1], [], []>} : vector<64x128xbf16>, vector<128x128xbf16>, vector<64x128xf32> -> vector<64x128xf32>
    %c0_95 = arith.constant 0 : index
    %c0_96 = arith.constant 0 : index
    %114 = vector.load %arg5[%c0_95, %c0_96] : memref<1x128xf32, #tpu.memory_space<vmem>>, vector<1x128xf32>
    %115 = vector.broadcast %114 : vector<1x128xf32> to vector<64x128xf32>
    %116 = arith.addf %113, %115 : vector<64x128xf32>
    %117 = vector.shape_cast %116 : vector<64x128xf32> to vector<8x8x128xf32>
    %c0_97 = arith.constant 0 : index
    %c0_98 = arith.constant 0 : index
    %c0_99 = arith.constant 0 : index
    %118 = vector.load %arg8[%c0_97, %c0_98, %c0_99] : memref<8x8x128xf32, #tpu.memory_space<vmem>>, vector<8x8x128xf32>
    tpu.vector_store %arg8[%c0_97, %c0_98, %c0_99], %117 {strides = array<i32>} : memref<8x8x128xf32, #tpu.memory_space<vmem>>, vector<8x8x128xf32>,
    %c0_100 = arith.constant 0 : index
    %c0_101 = arith.constant 0 : index
    %c0_102 = arith.constant 0 : index
    %119 = vector.load %arg8[%c0_100, %c0_101, %c0_102] : memref<8x8x128xf32, #tpu.memory_space<vmem>>, vector<1x8x128xf32>
    %120 = vector.shape_cast %119 : vector<1x8x128xf32> to vector<8x128xf32>
    %121 = math.tanh %120 : vector<8x128xf32>
    %c0_103 = arith.constant 0 : index
    %c0_104 = arith.constant 0 : index
    %122 = vector.load %arg9[%c0_103, %c0_104] : memref<8x128xf32, #tpu.memory_space<vmem>>, vector<8x128xf32>
    tpu.vector_store %arg9[%c0_103, %c0_104], %121 {strides = array<i32>} : memref<8x128xf32, #tpu.memory_space<vmem>>, vector<8x128xf32>,
    %c1_i32_105 = arith.constant 1 : i32
    %c0_106 = arith.constant 0 : index
    %c0_107 = arith.constant 0 : index
    %123 = vector.load %arg9[%c0_106, %c0_107] : memref<8x128xf32, #tpu.memory_space<vmem>>, vector<8x128xf32>
    %124 = arith.truncf %123 : vector<8x128xf32> to vector<8x128xbf16>
    %c0_108 = arith.constant 0 : index
    %c0_109 = arith.constant 0 : index
    %125 = vector.load %arg3[%c0_108, %c0_109] : memref<128x128xbf16, #tpu.memory_space<vmem>>, vector<128x128xbf16>
    %cst_110 = arith.constant dense<0.000000e+00> : vector<8x128xf32>
    %126 = tpu.matmul %124, %125, %cst_110 {dimension_numbers = #tpu.dot_dimension_numbers<[1], [0], [0], [1], [0, 0, 1, 1], [], []>} : vector<8x128xbf16>, vector<128x128xbf16>, vector<8x128xf32> -> vector<8x128xf32>
    %127 = arith.index_cast %c1_i32_105 : i32 to index
    %c0_111 = arith.constant 0 : index
    %c0_112 = arith.constant 0 : index
    %128 = vector.load %arg8[%127, %c0_111, %c0_112] : memref<8x8x128xf32, #tpu.memory_space<vmem>>, vector<1x8x128xf32>
    %129 = vector.shape_cast %128 : vector<1x8x128xf32> to vector<8x128xf32>
    %130 = arith.addf %129, %126 : vector<8x128xf32>
    %131 = math.tanh %130 : vector<8x128xf32>
    %c0_113 = arith.constant 0 : index
    %c0_114 = arith.constant 0 : index
    %132 = vector.load %arg9[%c0_113, %c0_114] : memref<8x128xf32, #tpu.memory_space<vmem>>, vector<8x128xf32>
    tpu.vector_store %arg9[%c0_113, %c0_114], %131 {strides = array<i32>} : memref<8x128xf32, #tpu.memory_space<vmem>>, vector<8x128xf32>,
    %c2_i32_115 = arith.constant 2 : i32
    %c0_116 = arith.constant 0 : index
    %c0_117 = arith.constant 0 : index
    %133 = vector.load %arg9[%c0_116, %c0_117] : memref<8x128xf32, #tpu.memory_space<vmem>>, vector<8x128xf32>
    %134 = arith.truncf %133 : vector<8x128xf32> to vector<8x128xbf16>
    %c0_118 = arith.constant 0 : index
    %c0_119 = arith.constant 0 : index
    %135 = vector.load %arg3[%c0_118, %c0_119] : memref<128x128xbf16, #tpu.memory_space<vmem>>, vector<128x128xbf16>
    %cst_120 = arith.constant dense<0.000000e+00> : vector<8x128xf32>
    %136 = tpu.matmul %134, %135, %cst_120 {dimension_numbers = #tpu.dot_dimension_numbers<[1], [0], [0], [1], [0, 0, 1, 1], [], []>} : vector<8x128xbf16>, vector<128x128xbf16>, vector<8x128xf32> -> vector<8x128xf32>
    %137 = arith.index_cast %c2_i32_115 : i32 to index
    %c0_121 = arith.constant 0 : index
    %c0_122 = arith.constant 0 : index
    %138 = vector.load %arg8[%137, %c0_121, %c0_122] : memref<8x8x128xf32, #tpu.memory_space<vmem>>, vector<1x8x128xf32>
    %139 = vector.shape_cast %138 : vector<1x8x128xf32> to vector<8x128xf32>
    %140 = arith.addf %139, %136 : vector<8x128xf32>
    %141 = math.tanh %140 : vector<8x128xf32>
    %c0_123 = arith.constant 0 : index
    %c0_124 = arith.constant 0 : index
    %142 = vector.load %arg9[%c0_123, %c0_124] : memref<8x128xf32, #tpu.memory_space<vmem>>, vector<8x128xf32>
    tpu.vector_store %arg9[%c0_123, %c0_124], %141 {strides = array<i32>} : memref<8x128xf32, #tpu.memory_space<vmem>>, vector<8x128xf32>,
    %c3_i32_125 = arith.constant 3 : i32
    %c0_126 = arith.constant 0 : index
    %c0_127 = arith.constant 0 : index
    %143 = vector.load %arg9[%c0_126, %c0_127] : memref<8x128xf32, #tpu.memory_space<vmem>>, vector<8x128xf32>
    %144 = arith.truncf %143 : vector<8x128xf32> to vector<8x128xbf16>
    %c0_128 = arith.constant 0 : index
    %c0_129 = arith.constant 0 : index
    %145 = vector.load %arg3[%c0_128, %c0_129] : memref<128x128xbf16, #tpu.memory_space<vmem>>, vector<128x128xbf16>
    %cst_130 = arith.constant dense<0.000000e+00> : vector<8x128xf32>
    %146 = tpu.matmul %144, %145, %cst_130 {dimension_numbers = #tpu.dot_dimension_numbers<[1], [0], [0], [1], [0, 0, 1, 1], [], []>} : vector<8x128xbf16>, vector<128x128xbf16>, vector<8x128xf32> -> vector<8x128xf32>
    %147 = arith.index_cast %c3_i32_125 : i32 to index
    %c0_131 = arith.constant 0 : index
    %c0_132 = arith.constant 0 : index
    %148 = vector.load %arg8[%147, %c0_131, %c0_132] : memref<8x8x128xf32, #tpu.memory_space<vmem>>, vector<1x8x128xf32>
    %149 = vector.shape_cast %148 : vector<1x8x128xf32> to vector<8x128xf32>
    %150 = arith.addf %149, %146 : vector<8x128xf32>
    %151 = math.tanh %150 : vector<8x128xf32>
    %c0_133 = arith.constant 0 : index
    %c0_134 = arith.constant 0 : index
    %152 = vector.load %arg9[%c0_133, %c0_134] : memref<8x128xf32, #tpu.memory_space<vmem>>, vector<8x128xf32>
    tpu.vector_store %arg9[%c0_133, %c0_134], %151 {strides = array<i32>} : memref<8x128xf32, #tpu.memory_space<vmem>>, vector<8x128xf32>,
    %c4_i32_135 = arith.constant 4 : i32
    %c0_136 = arith.constant 0 : index
    %c0_137 = arith.constant 0 : index
    %153 = vector.load %arg9[%c0_136, %c0_137] : memref<8x128xf32, #tpu.memory_space<vmem>>, vector<8x128xf32>
    %154 = arith.truncf %153 : vector<8x128xf32> to vector<8x128xbf16>
    %c0_138 = arith.constant 0 : index
    %c0_139 = arith.constant 0 : index
    %155 = vector.load %arg3[%c0_138, %c0_139] : memref<128x128xbf16, #tpu.memory_space<vmem>>, vector<128x128xbf16>
    %cst_140 = arith.constant dense<0.000000e+00> : vector<8x128xf32>
    %156 = tpu.matmul %154, %155, %cst_140 {dimension_numbers = #tpu.dot_dimension_numbers<[1], [0], [0], [1], [0, 0, 1, 1], [], []>} : vector<8x128xbf16>, vector<128x128xbf16>, vector<8x128xf32> -> vector<8x128xf32>
    %157 = arith.index_cast %c4_i32_135 : i32 to index
    %c0_141 = arith.constant 0 : index
    %c0_142 = arith.constant 0 : index
    %158 = vector.load %arg8[%157, %c0_141, %c0_142] : memref<8x8x128xf32, #tpu.memory_space<vmem>>, vector<1x8x128xf32>
    %159 = vector.shape_cast %158 : vector<1x8x128xf32> to vector<8x128xf32>
    %160 = arith.addf %159, %156 : vector<8x128xf32>
    %161 = math.tanh %160 : vector<8x128xf32>
    %c0_143 = arith.constant 0 : index
    %c0_144 = arith.constant 0 : index
    %162 = vector.load %arg9[%c0_143, %c0_144] : memref<8x128xf32, #tpu.memory_space<vmem>>, vector<8x128xf32>
    tpu.vector_store %arg9[%c0_143, %c0_144], %161 {strides = array<i32>} : memref<8x128xf32, #tpu.memory_space<vmem>>, vector<8x128xf32>,
    %c5_i32_145 = arith.constant 5 : i32
    %c0_146 = arith.constant 0 : index
    %c0_147 = arith.constant 0 : index
    %163 = vector.load %arg9[%c0_146, %c0_147] : memref<8x128xf32, #tpu.memory_space<vmem>>, vector<8x128xf32>
    %164 = arith.truncf %163 : vector<8x128xf32> to vector<8x128xbf16>
    %c0_148 = arith.constant 0 : index
    %c0_149 = arith.constant 0 : index
    %165 = vector.load %arg3[%c0_148, %c0_149] : memref<128x128xbf16, #tpu.memory_space<vmem>>, vector<128x128xbf16>
    %cst_150 = arith.constant dense<0.000000e+00> : vector<8x128xf32>
    %166 = tpu.matmul %164, %165, %cst_150 {dimension_numbers = #tpu.dot_dimension_numbers<[1], [0], [0], [1], [0, 0, 1, 1], [], []>} : vector<8x128xbf16>, vector<128x128xbf16>, vector<8x128xf32> -> vector<8x128xf32>
    %167 = arith.index_cast %c5_i32_145 : i32 to index
    %c0_151 = arith.constant 0 : index
    %c0_152 = arith.constant 0 : index
    %168 = vector.load %arg8[%167, %c0_151, %c0_152] : memref<8x8x128xf32, #tpu.memory_space<vmem>>, vector<1x8x128xf32>
    %169 = vector.shape_cast %168 : vector<1x8x128xf32> to vector<8x128xf32>
    %170 = arith.addf %169, %166 : vector<8x128xf32>
    %171 = math.tanh %170 : vector<8x128xf32>
    %c0_153 = arith.constant 0 : index
    %c0_154 = arith.constant 0 : index
    %172 = vector.load %arg9[%c0_153, %c0_154] : memref<8x128xf32, #tpu.memory_space<vmem>>, vector<8x128xf32>
    tpu.vector_store %arg9[%c0_153, %c0_154], %171 {strides = array<i32>} : memref<8x128xf32, #tpu.memory_space<vmem>>, vector<8x128xf32>,
    %c6_i32_155 = arith.constant 6 : i32
    %c0_156 = arith.constant 0 : index
    %c0_157 = arith.constant 0 : index
    %173 = vector.load %arg9[%c0_156, %c0_157] : memref<8x128xf32, #tpu.memory_space<vmem>>, vector<8x128xf32>
    %174 = arith.truncf %173 : vector<8x128xf32> to vector<8x128xbf16>
    %c0_158 = arith.constant 0 : index
    %c0_159 = arith.constant 0 : index
    %175 = vector.load %arg3[%c0_158, %c0_159] : memref<128x128xbf16, #tpu.memory_space<vmem>>, vector<128x128xbf16>
    %cst_160 = arith.constant dense<0.000000e+00> : vector<8x128xf32>
    %176 = tpu.matmul %174, %175, %cst_160 {dimension_numbers = #tpu.dot_dimension_numbers<[1], [0], [0], [1], [0, 0, 1, 1], [], []>} : vector<8x128xbf16>, vector<128x128xbf16>, vector<8x128xf32> -> vector<8x128xf32>
    %177 = arith.index_cast %c6_i32_155 : i32 to index
    %c0_161 = arith.constant 0 : index
    %c0_162 = arith.constant 0 : index
    %178 = vector.load %arg8[%177, %c0_161, %c0_162] : memref<8x8x128xf32, #tpu.memory_space<vmem>>, vector<1x8x128xf32>
    %179 = vector.shape_cast %178 : vector<1x8x128xf32> to vector<8x128xf32>
    %180 = arith.addf %179, %176 : vector<8x128xf32>
    %181 = math.tanh %180 : vector<8x128xf32>
    %c0_163 = arith.constant 0 : index
    %c0_164 = arith.constant 0 : index
    %182 = vector.load %arg9[%c0_163, %c0_164] : memref<8x128xf32, #tpu.memory_space<vmem>>, vector<8x128xf32>
    tpu.vector_store %arg9[%c0_163, %c0_164], %181 {strides = array<i32>} : memref<8x128xf32, #tpu.memory_space<vmem>>, vector<8x128xf32>,
    %c7_i32_165 = arith.constant 7 : i32
    %c0_166 = arith.constant 0 : index
    %c0_167 = arith.constant 0 : index
    %183 = vector.load %arg9[%c0_166, %c0_167] : memref<8x128xf32, #tpu.memory_space<vmem>>, vector<8x128xf32>
    %184 = arith.truncf %183 : vector<8x128xf32> to vector<8x128xbf16>
    %c0_168 = arith.constant 0 : index
    %c0_169 = arith.constant 0 : index
    %185 = vector.load %arg3[%c0_168, %c0_169] : memref<128x128xbf16, #tpu.memory_space<vmem>>, vector<128x128xbf16>
    %cst_170 = arith.constant dense<0.000000e+00> : vector<8x128xf32>
    %186 = tpu.matmul %184, %185, %cst_170 {dimension_numbers = #tpu.dot_dimension_numbers<[1], [0], [0], [1], [0, 0, 1, 1], [], []>} : vector<8x128xbf16>, vector<128x128xbf16>, vector<8x128xf32> -> vector<8x128xf32>
    %187 = arith.index_cast %c7_i32_165 : i32 to index
    %c0_171 = arith.constant 0 : index
    %c0_172 = arith.constant 0 : index
    %188 = vector.load %arg8[%187, %c0_171, %c0_172] : memref<8x8x128xf32, #tpu.memory_space<vmem>>, vector<1x8x128xf32>
    %189 = vector.shape_cast %188 : vector<1x8x128xf32> to vector<8x128xf32>
    %190 = arith.addf %189, %186 : vector<8x128xf32>
    %191 = math.tanh %190 : vector<8x128xf32>
    %c0_173 = arith.constant 0 : index
    %c0_174 = arith.constant 0 : index
    %192 = vector.load %arg9[%c0_173, %c0_174] : memref<8x128xf32, #tpu.memory_space<vmem>>, vector<8x128xf32>
    tpu.vector_store %arg9[%c0_173, %c0_174], %191 {strides = array<i32>} : memref<8x128xf32, #tpu.memory_space<vmem>>, vector<8x128xf32>,
    %c7_i32_175 = arith.constant 7 : i32
    %c0_176 = arith.constant 0 : index
    %c0_177 = arith.constant 0 : index
    %193 = vector.load %arg9[%c0_176, %c0_177] : memref<8x128xf32, #tpu.memory_space<vmem>>, vector<8x128xf32>
    %c1 = arith.constant 1 : index
    %c0_178 = arith.constant 0 : index
    %c0_179 = arith.constant 0 : index
    %194 = vector.load %arg6[%c1, %c0_178, %c0_179] : memref<2x8x128xf32, #tpu.memory_space<vmem>>, vector<1x8x128xf32>
    %195 = vector.shape_cast %194 : vector<1x8x128xf32> to vector<8x128xf32>
    %196 = vector.shape_cast %193 : vector<8x128xf32> to vector<1x8x128xf32>
    tpu.vector_store %arg6[%c1, %c0_178, %c0_179], %196 {strides = array<i32>} : memref<2x8x128xf32, #tpu.memory_space<vmem>>, vector<1x8x128xf32>,
    return
  }
  func.func @transform_0(%arg0: i32) -> (i32, i32, i32) {
    %c0_i32 = arith.constant 0 : i32
    %c0_i32_0 = arith.constant 0 : i32
    %c0_i32_1 = arith.constant 0 : i32
    %c0_i32_2 = arith.constant 0 : i32
    return %c0_i32, %c0_i32_0, %c0_i32_1 : i32, i32, i32
  }
  func.func @transform_1(%arg0: i32) -> (i32, i32) {
    %c0_i32 = arith.constant 0 : i32
    %c0_i32_0 = arith.constant 0 : i32
    %c0_i32_1 = arith.constant 0 : i32
    return %c0_i32, %c0_i32_0 : i32, i32
  }
  func.func @transform_2(%arg0: i32) -> (i32, i32) {
    %c0_i32 = arith.constant 0 : i32
    %c0_i32_0 = arith.constant 0 : i32
    %c0_i32_1 = arith.constant 0 : i32
    return %c0_i32, %c0_i32_0 : i32, i32
  }
  func.func @transform_3(%arg0: i32) -> (i32, i32) {
    %c0_i32 = arith.constant 0 : i32
    %c0_i32_0 = arith.constant 0 : i32
    %c0_i32_1 = arith.constant 0 : i32
    return %c0_i32, %c0_i32_0 : i32, i32
  }
  func.func @transform_4(%arg0: i32) -> (i32, i32) {
    %c0_i32 = arith.constant 0 : i32
    %c0_i32_0 = arith.constant 0 : i32
    %c0_i32_1 = arith.constant 0 : i32
    return %c0_i32, %c0_i32_0 : i32, i32
  }
  func.func @transform_5(%arg0: i32) -> (i32, i32, i32) {
    %c0_i32 = arith.constant 0 : i32
    %c0_i32_0 = arith.constant 0 : i32
    %c0_i32_1 = arith.constant 0 : i32
    %c0_i32_2 = arith.constant 0 : i32
    return %c0_i32, %c0_i32_0, %c0_i32_1 : i32, i32, i32
  }
}

</mosaic_0001>

<llo_original>
// kernel: encoder_forward.1
$region0: #{encoder_forward.1}
  #allocation0 [shape = 'u32[]', space=smem, size = 0x4, offset = 0x4, fixed_abs, tag = 'smem constant byte address 0x4 - core index']
  #allocation1 [shape = 'u32[72,128]{1,0:T(1,128)}', space=vmem, size = 0x9000, scoped, tag = 'internal scratch']
  #allocation2 [shape = 'f32[8,8,128]{2,1,0:T(8,128)}', space=vmem, size = 0x8000, scoped, tag = 'scratch operand']
  #allocation3 [shape = 'f32[8,8,128]{2,1,0:T(8,128)}', space=vmem, size = 0x8000, scoped, tag = 'scratch operand']
  #allocation4 [shape = 'f32[8,128]{1,0:T(8,128)}', space=vmem, size = 0x1000, scoped, tag = 'scratch operand']
  %s0 = inlined_call_operand.vmem [shape: f32[8,8,128], index: 0, kind: input, shape index: {}]
  %s1 = inlined_call_operand.vmem [shape: bf16[128,128], index: 1, kind: input, shape index: {}]
  %s2 = inlined_call_operand.vmem [shape: bf16[128,128], index: 2, kind: input, shape index: {}]
  %s3 = inlined_call_operand.vmem [shape: bf16[128,128], index: 3, kind: input, shape index: {}]
  %s4 = inlined_call_operand.vmem [shape: f32[1,128], index: 4, kind: input, shape index: {}]
  %s5 = inlined_call_operand.vmem [shape: f32[2,8,128], index: 5, kind: output, shape index: {}]
  %s6 = sld [smem:[#allocation0]]
  $region30: #{encoder_forward.1} parent=0
    _
  %s8 = ssub.s32 1, %s6
  %s9 = scalar_select 0, %s8, %s6
  // Predicated region
  $region2: #{encoder_forward.1} parent=0 // pred_check
    _
  $region3: #{encoder_forward.1} parent=0 // pred_check_branch
    %11 = sbr.rel (0) target = $region5
  $region4: #{encoder_forward.1} parent=0 // pred_region
    _
  $region5: #{encoder_forward.1} parent=0 // pred_fallthru
    _
  // Predicated region
  $region6: #{encoder_forward.1} parent=0 // pred_check
    _
  $region7: #{encoder_forward.1} parent=0 // pred_check_branch
    %13 = sbr.rel (0) target = $region9
  $region8: #{encoder_forward.1} parent=0 // pred_region
    _
  $region9: #{encoder_forward.1} parent=0 // pred_fallthru
    _
  // Predicated region
  $region10: #{encoder_forward.1} parent=0 // pred_check
    _
  $region11: #{encoder_forward.1} parent=0 // pred_check_branch
    %15 = sbr.rel (0) target = $region13
  $region12: #{encoder_forward.1} parent=0 // pred_region
    _
  $region13: #{encoder_forward.1} parent=0 // pred_fallthru
    _
  // Predicated region
  $region14: #{encoder_forward.1} parent=0 // pred_check
    _
  $region15: #{encoder_forward.1} parent=0 // pred_check_branch
    %17 = sbr.rel (0) target = $region17
  $region16: #{encoder_forward.1} parent=0 // pred_region
    _
  $region17: #{encoder_forward.1} parent=0 // pred_fallthru
    _
  // Predicated region
  $region18: #{encoder_forward.1} parent=0 // pred_check
    _
  $region19: #{encoder_forward.1} parent=0 // pred_check_branch
    %19 = sbr.rel (0) target = $region21
  $region20: #{encoder_forward.1} parent=0 // pred_region
    _
  $region21: #{encoder_forward.1} parent=0 // pred_fallthru
    _
  %v20 = vld [vmem:[%s0] sm:$0xff]
  %v21 = vtanh.pop %v20
  %22 = vst [vmem:[#allocation4] sm:$0xff] %v21
  %23 = vst [vmem:[#allocation2] sm:$0xff] %v21
  %v24 = vld [vmem:[#allocation4] sm:$0xff]
  %v25 = vpack.c.bf16 %v24, %v24
  %v26 = vld [vmem:[%s1] sm:$0xf]
  %v27 = vld [vmem:[%s1 + $0x4] sm:$0xf]
  %v28 = vld [vmem:[%s1 + $0x8] sm:$0xf]
  %v29 = vld [vmem:[%s1 + $0xc] sm:$0xf]
  %v30 = vld [vmem:[%s1 + $0x10] sm:$0xf]
  %v31 = vld [vmem:[%s1 + $0x14] sm:$0xf]
  %v32 = vld [vmem:[%s1 + $0x18] sm:$0xf]
  %v33 = vld [vmem:[%s1 + $0x1c] sm:$0xf]
  %v34 = vld [vmem:[%s1 + $0x20] sm:$0xf]
  %v35 = vld [vmem:[%s1 + $0x24] sm:$0xf]
  %v36 = vld [vmem:[%s1 + $0x28] sm:$0xf]
  %v37 = vld [vmem:[%s1 + $0x2c] sm:$0xf]
  %v38 = vld [vmem:[%s1 + $0x30] sm:$0xf]
  %v39 = vld [vmem:[%s1 + $0x34] sm:$0xf]
  %v40 = vld [vmem:[%s1 + $0x38] sm:$0xf]
  %v41 = vld [vmem:[%s1 + $0x3c] sm:$0xf]
  %v58 = vunpack.c.l.b16 %v26
  %v59 = vunpack.c.l.b16 %v27
  %v60 = vunpack.c.l.b16 %v28
  %v61 = vunpack.c.l.b16 %v29
  %v62 = vunpack.c.l.b16 %v30
  %v63 = vunpack.c.l.b16 %v31
  %v64 = vunpack.c.l.b16 %v32
  %v65 = vunpack.c.l.b16 %v33
  %v66 = vunpack.c.l.b16 %v34
  %v67 = vunpack.c.l.b16 %v35
  %v68 = vunpack.c.l.b16 %v36
  %v69 = vunpack.c.l.b16 %v37
  %v70 = vunpack.c.l.b16 %v38
  %v71 = vunpack.c.l.b16 %v39
  %v72 = vunpack.c.l.b16 %v40
  %v73 = vunpack.c.l.b16 %v41
  %v74 = vpack.c.b16 %v59, %v58
  %v75 = vpack.c.b16 %v61, %v60
  %v76 = vpack.c.b16 %v63, %v62
  %v77 = vpack.c.b16 %v65, %v64
  %v78 = vpack.c.b16 %v67, %v66
  %v79 = vpack.c.b16 %v69, %v68
  %v80 = vpack.c.b16 %v71, %v70
  %v81 = vpack.c.b16 %v73, %v72
  %90 = vmatpush.bf16.msra.mxu0 %v81
  %91 = vmatpush.bf16.msra.mxu0 %v80
  %92 = vmatpush.bf16.msra.mxu0 %v79
  %93 = vmatpush.bf16.msra.mxu0 %v78
  %94 = vmatpush.bf16.msra.mxu0 %v77
  %95 = vmatpush.bf16.msra.mxu0 %v76
  %96 = vmatpush.bf16.msra.mxu0 %v75
  %97 = vmatpush.bf16.msra.mxu0 %v74
  %98 = vmatmul.bf16.gmra.mxu0 %v25
  %v99 = vpop.f32.mrf.mxu0
  %v100 = vadd.f32 0.0, %v99
  %v101 = vpop.f32.mrf.mxu0
  %102 = vdwg.mxu0
  %s103 = scalar_lea.vmem %s0, 8
  %v104 = vld [vmem:[%s103] sm:$0xff]
  %v105 = vadd.f32 %v104, %v100
  %v106 = vtanh.pop %v105
  %107 = vst [vmem:[#allocation4] sm:$0xff] %v106
  %s108 = scalar_lea.vmem [#allocation2], 8
  %109 = vst [vmem:[%s108] sm:$0xff] %v106
  %v110 = vld [vmem:[#allocation4] sm:$0xff]
  %v111 = vpack.c.bf16 %v110, %v110
  %v112 = vld [vmem:[%s1] sm:$0xf]
  %v113 = vld [vmem:[%s1 + $0x4] sm:$0xf]
  %v114 = vld [vmem:[%s1 + $0x8] sm:$0xf]
  %v115 = vld [vmem:[%s1 + $0xc] sm:$0xf]
  %v116 = vld [vmem:[%s1 + $0x10] sm:$0xf]
  %v117 = vld [vmem:[%s1 + $0x14] sm:$0xf]
  %v118 = vld [vmem:[%s1 + $0x18] sm:$0xf]
  %v119 = vld [vmem:[%s1 + $0x1c] sm:$0xf]
  %v120 = vld [vmem:[%s1 + $0x20] sm:$0xf]
  %v121 = vld [vmem:[%s1 + $0x24] sm:$0xf]
  %v122 = vld [vmem:[%s1 + $0x28] sm:$0xf]
  %v123 = vld [vmem:[%s1 + $0x2c] sm:$0xf]
  %v124 = vld [vmem:[%s1 + $0x30] sm:$0xf]
  %v125 = vld [vmem:[%s1 + $0x34] sm:$0xf]
  %v126 = vld [vmem:[%s1 + $0x38] sm:$0xf]
  %v127 = vld [vmem:[%s1 + $0x3c] sm:$0xf]
  %v144 = vunpack.c.l.b16 %v112
  %v145 = vunpack.c.l.b16 %v113
  %v146 = vunpack.c.l.b16 %v114
  %v147 = vunpack.c.l.b16 %v115
  %v148 = vunpack.c.l.b16 %v116
  %v149 = vunpack.c.l.b16 %v117
  %v150 = vunpack.c.l.b16 %v118
  %v151 = vunpack.c.l.b16 %v119
  %v152 = vunpack.c.l.b16 %v120
  %v153 = vunpack.c.l.b16 %v121
  %v154 = vunpack.c.l.b16 %v122
  %v155 = vunpack.c.l.b16 %v123
  %v156 = vunpack.c.l.b16 %v124
  %v157 = vunpack.c.l.b16 %v125
  %v158 = vunpack.c.l.b16 %v126
  %v159 = vunpack.c.l.b16 %v127
  %v160 = vpack.c.b16 %v145, %v144
  %v161 = vpack.c.b16 %v147, %v146
  %v162 = vpack.c.b16 %v149, %v148
  %v163 = vpack.c.b16 %v151, %v150
  %v164 = vpack.c.b16 %v153, %v152
  %v165 = vpack.c.b16 %v155, %v154
  %v166 = vpack.c.b16 %v157, %v156
  %v167 = vpack.c.b16 %v159, %v158
  %176 = vmatpush.bf16.msra.mxu0 %v167
  %177 = vmatpush.bf16.msra.mxu0 %v166
  %178 = vmatpush.bf16.msra.mxu0 %v165
  %179 = vmatpush.bf16.msra.mxu0 %v164
  %180 = vmatpush.bf16.msra.mxu0 %v163
  %181 = vmatpush.bf16.msra.mxu0 %v162
  %182 = vmatpush.bf16.msra.mxu0 %v161
  %183 = vmatpush.bf16.msra.mxu0 %v160
  %184 = vmatmul.bf16.gmra.mxu0 %v111
  %v185 = vpop.f32.mrf.mxu0
  %v186 = vadd.f32 0.0, %v185
  %v187 = vpop.f32.mrf.mxu0
  %188 = vdwg.mxu0
  %s189 = scalar_lea.vmem %s0, 16
  %v190 = vld [vmem:[%s189] sm:$0xff]
  %v191 = vadd.f32 %v190, %v186
  %v192 = vtanh.pop %v191
  %193 = vst [vmem:[#allocation4] sm:$0xff] %v192
  %s194 = scalar_lea.vmem [#allocation2], 16
  %195 = vst [vmem:[%s194] sm:$0xff] %v192
  %v196 = vld [vmem:[#allocation4] sm:$0xff]
  %v197 = vpack.c.bf16 %v196, %v196
  %v198 = vld [vmem:[%s1] sm:$0xf]
  %v199 = vld [vmem:[%s1 + $0x4] sm:$0xf]
  %v200 = vld [vmem:[%s1 + $0x8] sm:$0xf]
  %v201 = vld [vmem:[%s1 + $0xc] sm:$0xf]
  %v202 = vld [vmem:[%s1 + $0x10] sm:$0xf]
  %v203 = vld [vmem:[%s1 + $0x14] sm:$0xf]
  %v204 = vld [vmem:[%s1 + $0x18] sm:$0xf]
  %v205 = vld [vmem:[%s1 + $0x1c] sm:$0xf]
  %v206 = vld [vmem:[%s1 + $0x20] sm:$0xf]
  %v207 = vld [vmem:[%s1 + $0x24] sm:$0xf]
  %v208 = vld [vmem:[%s1 + $0x28] sm:$0xf]
  %v209 = vld [vmem:[%s1 + $0x2c] sm:$0xf]
  %v210 = vld [vmem:[%s1 + $0x30] sm:$0xf]
  %v211 = vld [vmem:[%s1 + $0x34] sm:$0xf]
  %v212 = vld [vmem:[%s1 + $0x38] sm:$0xf]
  %v213 = vld [vmem:[%s1 + $0x3c] sm:$0xf]
  %v230 = vunpack.c.l.b16 %v198
  %v231 = vunpack.c.l.b16 %v199
  %v232 = vunpack.c.l.b16 %v200
  %v233 = vunpack.c.l.b16 %v201
  %v234 = vunpack.c.l.b16 %v202
  %v235 = vunpack.c.l.b16 %v203
  %v236 = vunpack.c.l.b16 %v204
  %v237 = vunpack.c.l.b16 %v205
  %v238 = vunpack.c.l.b16 %v206
  %v239 = vunpack.c.l.b16 %v207
  %v240 = vunpack.c.l.b16 %v208
  %v241 = vunpack.c.l.b16 %v209
  %v242 = vunpack.c.l.b16 %v210
  %v243 = vunpack.c.l.b16 %v211
  %v244 = vunpack.c.l.b16 %v212
  %v245 = vunpack.c.l.b16 %v213
  %v246 = vpack.c.b16 %v231, %v230
  %v247 = vpack.c.b16 %v233, %v232
  %v248 = vpack.c.b16 %v235, %v234
  %v249 = vpack.c.b16 %v237, %v236
  %v250 = vpack.c.b16 %v239, %v238
  %v251 = vpack.c.b16 %v241, %v240
  %v252 = vpack.c.b16 %v243, %v242
  %v253 = vpack.c.b16 %v245, %v244
  %262 = vmatpush.bf16.msra.mxu0 %v253
  %263 = vmatpush.bf16.msra.mxu0 %v252
  %264 = vmatpush.bf16.msra.mxu0 %v251
  %265 = vmatpush.bf16.msra.mxu0 %v250
  %266 = vmatpush.bf16.msra.mxu0 %v249
  %267 = vmatpush.bf16.msra.mxu0 %v248
  %268 = vmatpush.bf16.msra.mxu0 %v247
  %269 = vmatpush.bf16.msra.mxu0 %v246
  %270 = vmatmul.bf16.gmra.mxu0 %v197
  %v271 = vpop.f32.mrf.mxu0
  %v272 = vadd.f32 0.0, %v271
  %v273 = vpop.f32.mrf.mxu0
  %274 = vdwg.mxu0
  %s275 = scalar_lea.vmem %s0, 24
  %v276 = vld [vmem:[%s275] sm:$0xff]
  %v277 = vadd.f32 %v276, %v272
  %v278 = vtanh.pop %v277
  %279 = vst [vmem:[#allocation4] sm:$0xff] %v278
  %s280 = scalar_lea.vmem [#allocation2], 24
  %281 = vst [vmem:[%s280] sm:$0xff] %v278
  %v282 = vld [vmem:[#allocation4] sm:$0xff]
  %v283 = vpack.c.bf16 %v282, %v282
  %v284 = vld [vmem:[%s1] sm:$0xf]
  %v285 = vld [vmem:[%s1 + $0x4] sm:$0xf]
  %v286 = vld [vmem:[%s1 + $0x8] sm:$0xf]
  %v287 = vld [vmem:[%s1 + $0xc] sm:$0xf]
  %v288 = vld [vmem:[%s1 + $0x10] sm:$0xf]
  %v289 = vld [vmem:[%s1 + $0x14] sm:$0xf]
  %v290 = vld [vmem:[%s1 + $0x18] sm:$0xf]
  %v291 = vld [vmem:[%s1 + $0x1c] sm:$0xf]
  %v292 = vld [vmem:[%s1 + $0x20] sm:$0xf]
  %v293 = vld [vmem:[%s1 + $0x24] sm:$0xf]
  %v294 = vld [vmem:[%s1 + $0x28] sm:$0xf]
  %v295 = vld [vmem:[%s1 + $0x2c] sm:$0xf]
  %v296 = vld [vmem:[%s1 + $0x30] sm:$0xf]
  %v297 = vld [vmem:[%s1 + $0x34] sm:$0xf]
  %v298 = vld [vmem:[%s1 + $0x38] sm:$0xf]
  %v299 = vld [vmem:[%s1 + $0x3c] sm:$0xf]
  %v316 = vunpack.c.l.b16 %v284
  %v317 = vunpack.c.l.b16 %v285
  %v318 = vunpack.c.l.b16 %v286
  %v319 = vunpack.c.l.b16 %v287
  %v320 = vunpack.c.l.b16 %v288
  %v321 = vunpack.c.l.b16 %v289
  %v322 = vunpack.c.l.b16 %v290
  %v323 = vunpack.c.l.b16 %v291
  %v324 = vunpack.c.l.b16 %v292
  %v325 = vunpack.c.l.b16 %v293
  %v326 = vunpack.c.l.b16 %v294
  %v327 = vunpack.c.l.b16 %v295
  %v328 = vunpack.c.l.b16 %v296
  %v329 = vunpack.c.l.b16 %v297
  %v330 = vunpack.c.l.b16 %v298
  %v331 = vunpack.c.l.b16 %v299
  %v332 = vpack.c.b16 %v317, %v316
  %v333 = vpack.c.b16 %v319, %v318
  %v334 = vpack.c.b16 %v321, %v320
  %v335 = vpack.c.b16 %v323, %v322
  %v336 = vpack.c.b16 %v325, %v324
  %v337 = vpack.c.b16 %v327, %v326
  %v338 = vpack.c.b16 %v329, %v328
  %v339 = vpack.c.b16 %v331, %v330
  %348 = vmatpush.bf16.msra.mxu0 %v339
  %349 = vmatpush.bf16.msra.mxu0 %v338
  %350 = vmatpush.bf16.msra.mxu0 %v337
  %351 = vmatpush.bf16.msra.mxu0 %v336
  %352 = vmatpush.bf16.msra.mxu0 %v335
  %353 = vmatpush.bf16.msra.mxu0 %v334
  %354 = vmatpush.bf16.msra.mxu0 %v333
  %355 = vmatpush.bf16.msra.mxu0 %v332
  %356 = vmatmul.bf16.gmra.mxu0 %v283
  %v357 = vpop.f32.mrf.mxu0
  %v358 = vadd.f32 0.0, %v357
  %v359 = vpop.f32.mrf.mxu0
  %360 = vdwg.mxu0
  %s361 = scalar_lea.vmem %s0, 32
  %v362 = vld [vmem:[%s361] sm:$0xff]
  %v363 = vadd.f32 %v362, %v358
  %v364 = vtanh.pop %v363
  %365 = vst [vmem:[#allocation4] sm:$0xff] %v364
  %s366 = scalar_lea.vmem [#allocation2], 32
  %367 = vst [vmem:[%s366] sm:$0xff] %v364
  %v368 = vld [vmem:[#allocation4] sm:$0xff]
  %v369 = vpack.c.bf16 %v368, %v368
  %v370 = vld [vmem:[%s1] sm:$0xf]
  %v371 = vld [vmem:[%s1 + $0x4] sm:$0xf]
  %v372 = vld [vmem:[%s1 + $0x8] sm:$0xf]
  %v373 = vld [vmem:[%s1 + $0xc] sm:$0xf]
  %v374 = vld [vmem:[%s1 + $0x10] sm:$0xf]
  %v375 = vld [vmem:[%s1 + $0x14] sm:$0xf]
  %v376 = vld [vmem:[%s1 + $0x18] sm:$0xf]
  %v377 = vld [vmem:[%s1 + $0x1c] sm:$0xf]
  %v378 = vld [vmem:[%s1 + $0x20] sm:$0xf]
  %v379 = vld [vmem:[%s1 + $0x24] sm:$0xf]
  %v380 = vld [vmem:[%s1 + $0x28] sm:$0xf]
  %v381 = vld [vmem:[%s1 + $0x2c] sm:$0xf]
  %v382 = vld [vmem:[%s1 + $0x30] sm:$0xf]
  %v383 = vld [vmem:[%s1 + $0x34] sm:$0xf]
  %v384 = vld [vmem:[%s1 + $0x38] sm:$0xf]
  %v385 = vld [vmem:[%s1 + $0x3c] sm:$0xf]
  %v402 = vunpack.c.l.b16 %v370
  %v403 = vunpack.c.l.b16 %v371
  %v404 = vunpack.c.l.b16 %v372
  %v405 = vunpack.c.l.b16 %v373
  %v406 = vunpack.c.l.b16 %v374
  %v407 = vunpack.c.l.b16 %v375
  %v408 = vunpack.c.l.b16 %v376
  %v409 = vunpack.c.l.b16 %v377
  %v410 = vunpack.c.l.b16 %v378
  %v411 = vunpack.c.l.b16 %v379
  %v412 = vunpack.c.l.b16 %v380
  %v413 = vunpack.c.l.b16 %v381
  %v414 = vunpack.c.l.b16 %v382
  %v415 = vunpack.c.l.b16 %v383
  %v416 = vunpack.c.l.b16 %v384
  %v417 = vunpack.c.l.b16 %v385
  %v418 = vpack.c.b16 %v403, %v402
  %v419 = vpack.c.b16 %v405, %v404
  %v420 = vpack.c.b16 %v407, %v406
  %v421 = vpack.c.b16 %v409, %v408
  %v422 = vpack.c.b16 %v411, %v410
  %v423 = vpack.c.b16 %v413, %v412
  %v424 = vpack.c.b16 %v415, %v414
  %v425 = vpack.c.b16 %v417, %v416
  %434 = vmatpush.bf16.msra.mxu0 %v425
  %435 = vmatpush.bf16.msra.mxu0 %v424
  %436 = vmatpush.bf16.msra.mxu0 %v423
  %437 = vmatpush.bf16.msra.mxu0 %v422
  %438 = vmatpush.bf16.msra.mxu0 %v421
  %439 = vmatpush.bf16.msra.mxu0 %v420
  %440 = vmatpush.bf16.msra.mxu0 %v419
  %441 = vmatpush.bf16.msra.mxu0 %v418
  %442 = vmatmul.bf16.gmra.mxu0 %v369
  %v443 = vpop.f32.mrf.mxu0
  %v444 = vadd.f32 0.0, %v443
  %v445 = vpop.f32.mrf.mxu0
  %446 = vdwg.mxu0
  %s447 = scalar_lea.vmem %s0, 40
  %v448 = vld [vmem:[%s447] sm:$0xff]
  %v449 = vadd.f32 %v448, %v444
  %v450 = vtanh.pop %v449
  %451 = vst [vmem:[#allocation4] sm:$0xff] %v450
  %s452 = scalar_lea.vmem [#allocation2], 40
  %453 = vst [vmem:[%s452] sm:$0xff] %v450
  %v454 = vld [vmem:[#allocation4] sm:$0xff]
  %v455 = vpack.c.bf16 %v454, %v454
  %v456 = vld [vmem:[%s1] sm:$0xf]
  %v457 = vld [vmem:[%s1 + $0x4] sm:$0xf]
  %v458 = vld [vmem:[%s1 + $0x8] sm:$0xf]
  %v459 = vld [vmem:[%s1 + $0xc] sm:$0xf]
  %v460 = vld [vmem:[%s1 + $0x10] sm:$0xf]
  %v461 = vld [vmem:[%s1 + $0x14] sm:$0xf]
  %v462 = vld [vmem:[%s1 + $0x18] sm:$0xf]
  %v463 = vld [vmem:[%s1 + $0x1c] sm:$0xf]
  %v464 = vld [vmem:[%s1 + $0x20] sm:$0xf]
  %v465 = vld [vmem:[%s1 + $0x24] sm:$0xf]
  %v466 = vld [vmem:[%s1 + $0x28] sm:$0xf]
  %v467 = vld [vmem:[%s1 + $0x2c] sm:$0xf]
  %v468 = vld [vmem:[%s1 + $0x30] sm:$0xf]
  %v469 = vld [vmem:[%s1 + $0x34] sm:$0xf]
  %v470 = vld [vmem:[%s1 + $0x38] sm:$0xf]
  %v471 = vld [vmem:[%s1 + $0x3c] sm:$0xf]
  %v488 = vunpack.c.l.b16 %v456
  %v489 = vunpack.c.l.b16 %v457
  %v490 = vunpack.c.l.b16 %v458
  %v491 = vunpack.c.l.b16 %v459
  %v492 = vunpack.c.l.b16 %v460
  %v493 = vunpack.c.l.b16 %v461
  %v494 = vunpack.c.l.b16 %v462
  %v495 = vunpack.c.l.b16 %v463
  %v496 = vunpack.c.l.b16 %v464
  %v497 = vunpack.c.l.b16 %v465
  %v498 = vunpack.c.l.b16 %v466
  %v499 = vunpack.c.l.b16 %v467
  %v500 = vunpack.c.l.b16 %v468
  %v501 = vunpack.c.l.b16 %v469
  %v502 = vunpack.c.l.b16 %v470
  %v503 = vunpack.c.l.b16 %v471
  %v504 = vpack.c.b16 %v489, %v488
  %v505 = vpack.c.b16 %v491, %v490
  %v506 = vpack.c.b16 %v493, %v492
  %v507 = vpack.c.b16 %v495, %v494
  %v508 = vpack.c.b16 %v497, %v496
  %v509 = vpack.c.b16 %v499, %v498
  %v510 = vpack.c.b16 %v501, %v500
  %v511 = vpack.c.b16 %v503, %v502
  %520 = vmatpush.bf16.msra.mxu0 %v511
  %521 = vmatpush.bf16.msra.mxu0 %v510
  %522 = vmatpush.bf16.msra.mxu0 %v509
  %523 = vmatpush.bf16.msra.mxu0 %v508
  %524 = vmatpush.bf16.msra.mxu0 %v507
  %525 = vmatpush.bf16.msra.mxu0 %v506
  %526 = vmatpush.bf16.msra.mxu0 %v505
  %527 = vmatpush.bf16.msra.mxu0 %v504
  %528 = vmatmul.bf16.gmra.mxu0 %v455
  %v529 = vpop.f32.mrf.mxu0
  %v530 = vadd.f32 0.0, %v529
  %v531 = vpop.f32.mrf.mxu0
  %532 = vdwg.mxu0
  %s533 = scalar_lea.vmem %s0, 48
  %v534 = vld [vmem:[%s533] sm:$0xff]
  %v535 = vadd.f32 %v534, %v530
  %v536 = vtanh.pop %v535
  %537 = vst [vmem:[#allocation4] sm:$0xff] %v536
  %s538 = scalar_lea.vmem [#allocation2], 48
  %539 = vst [vmem:[%s538] sm:$0xff] %v536
  %v540 = vld [vmem:[#allocation4] sm:$0xff]
  %v541 = vpack.c.bf16 %v540, %v540
  %v542 = vld [vmem:[%s1] sm:$0xf]
  %v543 = vld [vmem:[%s1 + $0x4] sm:$0xf]
  %v544 = vld [vmem:[%s1 + $0x8] sm:$0xf]
  %v545 = vld [vmem:[%s1 + $0xc] sm:$0xf]
  %v546 = vld [vmem:[%s1 + $0x10] sm:$0xf]
  %v547 = vld [vmem:[%s1 + $0x14] sm:$0xf]
  %v548 = vld [vmem:[%s1 + $0x18] sm:$0xf]
  %v549 = vld [vmem:[%s1 + $0x1c] sm:$0xf]
  %v550 = vld [vmem:[%s1 + $0x20] sm:$0xf]
  %v551 = vld [vmem:[%s1 + $0x24] sm:$0xf]
  %v552 = vld [vmem:[%s1 + $0x28] sm:$0xf]
  %v553 = vld [vmem:[%s1 + $0x2c] sm:$0xf]
  %v554 = vld [vmem:[%s1 + $0x30] sm:$0xf]
  %v555 = vld [vmem:[%s1 + $0x34] sm:$0xf]
  %v556 = vld [vmem:[%s1 + $0x38] sm:$0xf]
  %v557 = vld [vmem:[%s1 + $0x3c] sm:$0xf]
  %v574 = vunpack.c.l.b16 %v542
  %v575 = vunpack.c.l.b16 %v543
  %v576 = vunpack.c.l.b16 %v544
  %v577 = vunpack.c.l.b16 %v545
  %v578 = vunpack.c.l.b16 %v546
  %v579 = vunpack.c.l.b16 %v547
  %v580 = vunpack.c.l.b16 %v548
  %v581 = vunpack.c.l.b16 %v549
  %v582 = vunpack.c.l.b16 %v550
  %v583 = vunpack.c.l.b16 %v551
  %v584 = vunpack.c.l.b16 %v552
  %v585 = vunpack.c.l.b16 %v553
  %v586 = vunpack.c.l.b16 %v554
  %v587 = vunpack.c.l.b16 %v555
  %v588 = vunpack.c.l.b16 %v556
  %v589 = vunpack.c.l.b16 %v557
  %v590 = vpack.c.b16 %v575, %v574
  %v591 = vpack.c.b16 %v577, %v576
  %v592 = vpack.c.b16 %v579, %v578
  %v593 = vpack.c.b16 %v581, %v580
  %v594 = vpack.c.b16 %v583, %v582
  %v595 = vpack.c.b16 %v585, %v584
  %v596 = vpack.c.b16 %v587, %v586
  %v597 = vpack.c.b16 %v589, %v588
  %606 = vmatpush.bf16.msra.mxu0 %v597
  %607 = vmatpush.bf16.msra.mxu0 %v596
  %608 = vmatpush.bf16.msra.mxu0 %v595
  %609 = vmatpush.bf16.msra.mxu0 %v594
  %610 = vmatpush.bf16.msra.mxu0 %v593
  %611 = vmatpush.bf16.msra.mxu0 %v592
  %612 = vmatpush.bf16.msra.mxu0 %v591
  %613 = vmatpush.bf16.msra.mxu0 %v590
  %614 = vmatmul.bf16.gmra.mxu0 %v541
  %v615 = vpop.f32.mrf.mxu0
  %v616 = vadd.f32 0.0, %v615
  %v617 = vpop.f32.mrf.mxu0
  %618 = vdwg.mxu0
  %s619 = scalar_lea.vmem %s0, 56
  %v620 = vld [vmem:[%s619] sm:$0xff]
  %v621 = vadd.f32 %v620, %v616
  %v622 = vtanh.pop %v621
  %623 = vst [vmem:[#allocation4] sm:$0xff] %v622
  %s624 = scalar_lea.vmem [#allocation2], 56
  %625 = vst [vmem:[%s624] sm:$0xff] %v622
  %v626 = vld [vmem:[#allocation4] sm:$0xff]
  %627 = vst [vmem:[%s5] sm:$0xff] %v626
  %v628 = vld [vmem:[#allocation2] sm:$0xff]
  %v629 = vld [vmem:[#allocation2 + $0x8] sm:$0xff]
  %v630 = vld [vmem:[#allocation2 + $0x10] sm:$0xff]
  %v631 = vld [vmem:[#allocation2 + $0x18] sm:$0xff]
  %v632 = vld [vmem:[#allocation2 + $0x20] sm:$0xff]
  %v633 = vld [vmem:[#allocation2 + $0x28] sm:$0xff]
  %v634 = vld [vmem:[#allocation2 + $0x30] sm:$0xff]
  %v635 = vld [vmem:[#allocation2 + $0x38] sm:$0xff]
  %v636 = vpack.c.bf16 %v629, %v628
  %v637 = vpack.c.bf16 %v631, %v630
  %v638 = vpack.c.bf16 %v633, %v632
  %v639 = vpack.c.bf16 %v635, %v634
  %v640 = vld [vmem:[%s3] sm:$0xf]
  %v641 = vld [vmem:[%s3 + $0x4] sm:$0xf]
  %v642 = vld [vmem:[%s3 + $0x8] sm:$0xf]
  %v643 = vld [vmem:[%s3 + $0xc] sm:$0xf]
  %v644 = vld [vmem:[%s3 + $0x10] sm:$0xf]
  %v645 = vld [vmem:[%s3 + $0x14] sm:$0xf]
  %v646 = vld [vmem:[%s3 + $0x18] sm:$0xf]
  %v647 = vld [vmem:[%s3 + $0x1c] sm:$0xf]
  %v648 = vld [vmem:[%s3 + $0x20] sm:$0xf]
  %v649 = vld [vmem:[%s3 + $0x24] sm:$0xf]
  %v650 = vld [vmem:[%s3 + $0x28] sm:$0xf]
  %v651 = vld [vmem:[%s3 + $0x2c] sm:$0xf]
  %v652 = vld [vmem:[%s3 + $0x30] sm:$0xf]
  %v653 = vld [vmem:[%s3 + $0x34] sm:$0xf]
  %v654 = vld [vmem:[%s3 + $0x38] sm:$0xf]
  %v655 = vld [vmem:[%s3 + $0x3c] sm:$0xf]
  %v656 = vld [vmem:[%s4] sm:$0x1]
  %v658 = vperm.slane %v656, 0
  %v676 = vunpack.c.l.b16 %v640
  %v677 = vunpack.c.l.b16 %v641
  %v678 = vunpack.c.l.b16 %v642
  %v679 = vunpack.c.l.b16 %v643
  %v680 = vunpack.c.l.b16 %v644
  %v681 = vunpack.c.l.b16 %v645
  %v682 = vunpack.c.l.b16 %v646
  %v683 = vunpack.c.l.b16 %v647
  %v684 = vunpack.c.l.b16 %v648
  %v685 = vunpack.c.l.b16 %v649
  %v686 = vunpack.c.l.b16 %v650
  %v687 = vunpack.c.l.b16 %v651
  %v688 = vunpack.c.l.b16 %v652
  %v689 = vunpack.c.l.b16 %v653
  %v690 = vunpack.c.l.b16 %v654
  %v691 = vunpack.c.l.b16 %v655
  %v692 = vpack.c.b16 %v677, %v676
  %v693 = vpack.c.b16 %v679, %v678
  %v694 = vpack.c.b16 %v681, %v680
  %v695 = vpack.c.b16 %v683, %v682
  %v696 = vpack.c.b16 %v685, %v684
  %v697 = vpack.c.b16 %v687, %v686
  %v698 = vpack.c.b16 %v689, %v688
  %v699 = vpack.c.b16 %v691, %v690
  %708 = vmatpush.bf16.msra.mxu0 %v699
  %709 = vmatpush.bf16.msra.mxu0 %v698
  %710 = vmatpush.bf16.msra.mxu0 %v697
  %711 = vmatpush.bf16.msra.mxu0 %v696
  %712 = vmatpush.bf16.msra.mxu0 %v695
  %713 = vmatpush.bf16.msra.mxu0 %v694
  %714 = vmatpush.bf16.msra.mxu0 %v693
  %715 = vmatpush.bf16.msra.mxu0 %v692
  %716 = vmatmul.bf16.gmra.mxu0 %v636
  %v717 = vpop.f32.mrf.mxu0
  %v718 = vadd.f32 %v658, %v717
  %v719 = vpop.f32.mrf.mxu0
  %v720 = vadd.f32 %v658, %v719
  %721 = vmatmul.bf16.gmra.mxu0 %v637
  %v722 = vpop.f32.mrf.mxu0
  %v723 = vadd.f32 %v658, %v722
  %v724 = vpop.f32.mrf.mxu0
  %v725 = vadd.f32 %v658, %v724
  %726 = vmatmul.bf16.gmra.mxu0 %v638
  %v727 = vpop.f32.mrf.mxu0
  %v728 = vadd.f32 %v658, %v727
  %v729 = vpop.f32.mrf.mxu0
  %v730 = vadd.f32 %v658, %v729
  %731 = vmatmul.bf16.gmra.mxu0 %v639
  %v732 = vpop.f32.mrf.mxu0
  %v733 = vadd.f32 %v658, %v732
  %v734 = vpop.f32.mrf.mxu0
  %v735 = vadd.f32 %v658, %v734
  %736 = vdwg.mxu0
  %737 = vst [vmem:[#allocation3] sm:$0xff] %v718
  %738 = vst [vmem:[#allocation3 + $0x8] sm:$0xff] %v720
  %739 = vst [vmem:[#allocation3 + $0x10] sm:$0xff] %v723
  %740 = vst [vmem:[#allocation3 + $0x18] sm:$0xff] %v725
  %741 = vst [vmem:[#allocation3 + $0x20] sm:$0xff] %v728
  %742 = vst [vmem:[#allocation3 + $0x28] sm:$0xff] %v730
  %743 = vst [vmem:[#allocation3 + $0x30] sm:$0xff] %v733
  %744 = vst [vmem:[#allocation3 + $0x38] sm:$0xff] %v735
  %v745 = vld [vmem:[#allocation3] sm:$0xff]
  %v746 = vtanh.pop %v745
  %747 = vst [vmem:[#allocation4] sm:$0xff] %v746
  %v748 = vld [vmem:[#allocation4] sm:$0xff]
  %v749 = vpack.c.bf16 %v748, %v748
  %v750 = vld [vmem:[%s2] sm:$0xf]
  %v751 = vld [vmem:[%s2 + $0x4] sm:$0xf]
  %v752 = vld [vmem:[%s2 + $0x8] sm:$0xf]
  %v753 = vld [vmem:[%s2 + $0xc] sm:$0xf]
  %v754 = vld [vmem:[%s2 + $0x10] sm:$0xf]
  %v755 = vld [vmem:[%s2 + $0x14] sm:$0xf]
  %v756 = vld [vmem:[%s2 + $0x18] sm:$0xf]
  %v757 = vld [vmem:[%s2 + $0x1c] sm:$0xf]
  %v758 = vld [vmem:[%s2 + $0x20] sm:$0xf]
  %v759 = vld [vmem:[%s2 + $0x24] sm:$0xf]
  %v760 = vld [vmem:[%s2 + $0x28] sm:$0xf]
  %v761 = vld [vmem:[%s2 + $0x2c] sm:$0xf]
  %v762 = vld [vmem:[%s2 + $0x30] sm:$0xf]
  %v763 = vld [vmem:[%s2 + $0x34] sm:$0xf]
  %v764 = vld [vmem:[%s2 + $0x38] sm:$0xf]
  %v765 = vld [vmem:[%s2 + $0x3c] sm:$0xf]
  %v782 = vunpack.c.l.b16 %v750
  %v783 = vunpack.c.l.b16 %v751
  %v784 = vunpack.c.l.b16 %v752
  %v785 = vunpack.c.l.b16 %v753
  %v786 = vunpack.c.l.b16 %v754
  %v787 = vunpack.c.l.b16 %v755
  %v788 = vunpack.c.l.b16 %v756
  %v789 = vunpack.c.l.b16 %v757
  %v790 = vunpack.c.l.b16 %v758
  %v791 = vunpack.c.l.b16 %v759
  %v792 = vunpack.c.l.b16 %v760
  %v793 = vunpack.c.l.b16 %v761
  %v794 = vunpack.c.l.b16 %v762
  %v795 = vunpack.c.l.b16 %v763
  %v796 = vunpack.c.l.b16 %v764
  %v797 = vunpack.c.l.b16 %v765
  %v798 = vpack.c.b16 %v783, %v782
  %v799 = vpack.c.b16 %v785, %v784
  %v800 = vpack.c.b16 %v787, %v786
  %v801 = vpack.c.b16 %v789, %v788
  %v802 = vpack.c.b16 %v791, %v790
  %v803 = vpack.c.b16 %v793, %v792
  %v804 = vpack.c.b16 %v795, %v794
  %v805 = vpack.c.b16 %v797, %v796
  %814 = vmatpush.bf16.msra.mxu0 %v805
  %815 = vmatpush.bf16.msra.mxu0 %v804
  %816 = vmatpush.bf16.msra.mxu0 %v803
  %817 = vmatpush.bf16.msra.mxu0 %v802
  %818 = vmatpush.bf16.msra.mxu0 %v801
  %819 = vmatpush.bf16.msra.mxu0 %v800
  %820 = vmatpush.bf16.msra.mxu0 %v799
  %821 = vmatpush.bf16.msra.mxu0 %v798
  %822 = vmatmul.bf16.gmra.mxu0 %v749
  %v823 = vpop.f32.mrf.mxu0
  %v824 = vadd.f32 0.0, %v823
  %v825 = vpop.f32.mrf.mxu0
  %826 = vdwg.mxu0
  %s827 = scalar_lea.vmem [#allocation3], 8
  %v828 = vld [vmem:[%s827] sm:$0xff]
  %v829 = vadd.f32 %v828, %v824
  %v830 = vtanh.pop %v829
  %831 = vst [vmem:[#allocation4] sm:$0xff] %v830
  %v832 = vld [vmem:[#allocation4] sm:$0xff]
  %v833 = vpack.c.bf16 %v832, %v832
  %v834 = vld [vmem:[%s2] sm:$0xf]
  %v835 = vld [vmem:[%s2 + $0x4] sm:$0xf]
  %v836 = vld [vmem:[%s2 + $0x8] sm:$0xf]
  %v837 = vld [vmem:[%s2 + $0xc] sm:$0xf]
  %v838 = vld [vmem:[%s2 + $0x10] sm:$0xf]
  %v839 = vld [vmem:[%s2 + $0x14] sm:$0xf]
  %v840 = vld [vmem:[%s2 + $0x18] sm:$0xf]
  %v841 = vld [vmem:[%s2 + $0x1c] sm:$0xf]
  %v842 = vld [vmem:[%s2 + $0x20] sm:$0xf]
  %v843 = vld [vmem:[%s2 + $0x24] sm:$0xf]
  %v844 = vld [vmem:[%s2 + $0x28] sm:$0xf]
  %v845 = vld [vmem:[%s2 + $0x2c] sm:$0xf]
  %v846 = vld [vmem:[%s2 + $0x30] sm:$0xf]
  %v847 = vld [vmem:[%s2 + $0x34] sm:$0xf]
  %v848 = vld [vmem:[%s2 + $0x38] sm:$0xf]
  %v849 = vld [vmem:[%s2 + $0x3c] sm:$0xf]
  %v866 = vunpack.c.l.b16 %v834
  %v867 = vunpack.c.l.b16 %v835
  %v868 = vunpack.c.l.b16 %v836
  %v869 = vunpack.c.l.b16 %v837
  %v870 = vunpack.c.l.b16 %v838
  %v871 = vunpack.c.l.b16 %v839
  %v872 = vunpack.c.l.b16 %v840
  %v873 = vunpack.c.l.b16 %v841
  %v874 = vunpack.c.l.b16 %v842
  %v875 = vunpack.c.l.b16 %v843
  %v876 = vunpack.c.l.b16 %v844
  %v877 = vunpack.c.l.b16 %v845
  %v878 = vunpack.c.l.b16 %v846
  %v879 = vunpack.c.l.b16 %v847
  %v880 = vunpack.c.l.b16 %v848
  %v881 = vunpack.c.l.b16 %v849
  %v882 = vpack.c.b16 %v867, %v866
  %v883 = vpack.c.b16 %v869, %v868
  %v884 = vpack.c.b16 %v871, %v870
  %v885 = vpack.c.b16 %v873, %v872
  %v886 = vpack.c.b16 %v875, %v874
  %v887 = vpack.c.b16 %v877, %v876
  %v888 = vpack.c.b16 %v879, %v878
  %v889 = vpack.c.b16 %v881, %v880
  %898 = vmatpush.bf16.msra.mxu0 %v889
  %899 = vmatpush.bf16.msra.mxu0 %v888
  %900 = vmatpush.bf16.msra.mxu0 %v887
  %901 = vmatpush.bf16.msra.mxu0 %v886
  %902 = vmatpush.bf16.msra.mxu0 %v885
  %903 = vmatpush.bf16.msra.mxu0 %v884
  %904 = vmatpush.bf16.msra.mxu0 %v883
  %905 = vmatpush.bf16.msra.mxu0 %v882
  %906 = vmatmul.bf16.gmra.mxu0 %v833
  %v907 = vpop.f32.mrf.mxu0
  %v908 = vadd.f32 0.0, %v907
  %v909 = vpop.f32.mrf.mxu0
  %910 = vdwg.mxu0
  %s911 = scalar_lea.vmem [#allocation3], 16
  %v912 = vld [vmem:[%s911] sm:$0xff]
  %v913 = vadd.f32 %v912, %v908
  %v914 = vtanh.pop %v913
  %915 = vst [vmem:[#allocation4] sm:$0xff] %v914
  %v916 = vld [vmem:[#allocation4] sm:$0xff]
  %v917 = vpack.c.bf16 %v916, %v916
  %v918 = vld [vmem:[%s2] sm:$0xf]
  %v919 = vld [vmem:[%s2 + $0x4] sm:$0xf]
  %v920 = vld [vmem:[%s2 + $0x8] sm:$0xf]
  %v921 = vld [vmem:[%s2 + $0xc] sm:$0xf]
  %v922 = vld [vmem:[%s2 + $0x10] sm:$0xf]
  %v923 = vld [vmem:[%s2 + $0x14] sm:$0xf]
  %v924 = vld [vmem:[%s2 + $0x18] sm:$0xf]
  %v925 = vld [vmem:[%s2 + $0x1c] sm:$0xf]
  %v926 = vld [vmem:[%s2 + $0x20] sm:$0xf]
  %v927 = vld [vmem:[%s2 + $0x24] sm:$0xf]
  %v928 = vld [vmem:[%s2 + $0x28] sm:$0xf]
  %v929 = vld [vmem:[%s2 + $0x2c] sm:$0xf]
  %v930 = vld [vmem:[%s2 + $0x30] sm:$0xf]
  %v931 = vld [vmem:[%s2 + $0x34] sm:$0xf]
  %v932 = vld [vmem:[%s2 + $0x38] sm:$0xf]
  %v933 = vld [vmem:[%s2 + $0x3c] sm:$0xf]
  %v950 = vunpack.c.l.b16 %v918
  %v951 = vunpack.c.l.b16 %v919
  %v952 = vunpack.c.l.b16 %v920
  %v953 = vunpack.c.l.b16 %v921
  %v954 = vunpack.c.l.b16 %v922
  %v955 = vunpack.c.l.b16 %v923
  %v956 = vunpack.c.l.b16 %v924
  %v957 = vunpack.c.l.b16 %v925
  %v958 = vunpack.c.l.b16 %v926
  %v959 = vunpack.c.l.b16 %v927
  %v960 = vunpack.c.l.b16 %v928
  %v961 = vunpack.c.l.b16 %v929
  %v962 = vunpack.c.l.b16 %v930
  %v963 = vunpack.c.l.b16 %v931
  %v964 = vunpack.c.l.b16 %v932
  %v965 = vunpack.c.l.b16 %v933
  %v966 = vpack.c.b16 %v951, %v950
  %v967 = vpack.c.b16 %v953, %v952
  %v968 = vpack.c.b16 %v955, %v954
  %v969 = vpack.c.b16 %v957, %v956
  %v970 = vpack.c.b16 %v959, %v958
  %v971 = vpack.c.b16 %v961, %v960
  %v972 = vpack.c.b16 %v963, %v962
  %v973 = vpack.c.b16 %v965, %v964
  %982 = vmatpush.bf16.msra.mxu0 %v973
  %983 = vmatpush.bf16.msra.mxu0 %v972
  %984 = vmatpush.bf16.msra.mxu0 %v971
  %985 = vmatpush.bf16.msra.mxu0 %v970
  %986 = vmatpush.bf16.msra.mxu0 %v969
  %987 = vmatpush.bf16.msra.mxu0 %v968
  %988 = vmatpush.bf16.msra.mxu0 %v967
  %989 = vmatpush.bf16.msra.mxu0 %v966
  %990 = vmatmul.bf16.gmra.mxu0 %v917
  %v991 = vpop.f32.mrf.mxu0
  %v992 = vadd.f32 0.0, %v991
  %v993 = vpop.f32.mrf.mxu0
  %994 = vdwg.mxu0
  %s995 = scalar_lea.vmem [#allocation3], 24
  %v996 = vld [vmem:[%s995] sm:$0xff]
  %v997 = vadd.f32 %v996, %v992
  %v998 = vtanh.pop %v997
  %999 = vst [vmem:[#allocation4] sm:$0xff] %v998
  %v1000 = vld [vmem:[#allocation4] sm:$0xff]
  %v1001 = vpack.c.bf16 %v1000, %v1000
  %v1002 = vld [vmem:[%s2] sm:$0xf]
  %v1003 = vld [vmem:[%s2 + $0x4] sm:$0xf]
  %v1004 = vld [vmem:[%s2 + $0x8] sm:$0xf]
  %v1005 = vld [vmem:[%s2 + $0xc] sm:$0xf]
  %v1006 = vld [vmem:[%s2 + $0x10] sm:$0xf]
  %v1007 = vld [vmem:[%s2 + $0x14] sm:$0xf]
  %v1008 = vld [vmem:[%s2 + $0x18] sm:$0xf]
  %v1009 = vld [vmem:[%s2 + $0x1c] sm:$0xf]
  %v1010 = vld [vmem:[%s2 + $0x20] sm:$0xf]
  %v1011 = vld [vmem:[%s2 + $0x24] sm:$0xf]
  %v1012 = vld [vmem:[%s2 + $0x28] sm:$0xf]
  %v1013 = vld [vmem:[%s2 + $0x2c] sm:$0xf]
  %v1014 = vld [vmem:[%s2 + $0x30] sm:$0xf]
  %v1015 = vld [vmem:[%s2 + $0x34] sm:$0xf]
  %v1016 = vld [vmem:[%s2 + $0x38] sm:$0xf]
  %v1017 = vld [vmem:[%s2 + $0x3c] sm:$0xf]
  %v1034 = vunpack.c.l.b16 %v1002
  %v1035 = vunpack.c.l.b16 %v1003
  %v1036 = vunpack.c.l.b16 %v1004
  %v1037 = vunpack.c.l.b16 %v1005
  %v1038 = vunpack.c.l.b16 %v1006
  %v1039 = vunpack.c.l.b16 %v1007
  %v1040 = vunpack.c.l.b16 %v1008
  %v1041 = vunpack.c.l.b16 %v1009
  %v1042 = vunpack.c.l.b16 %v1010
  %v1043 = vunpack.c.l.b16 %v1011
  %v1044 = vunpack.c.l.b16 %v1012
  %v1045 = vunpack.c.l.b16 %v1013
  %v1046 = vunpack.c.l.b16 %v1014
  %v1047 = vunpack.c.l.b16 %v1015
  %v1048 = vunpack.c.l.b16 %v1016
  %v1049 = vunpack.c.l.b16 %v1017
  %v1050 = vpack.c.b16 %v1035, %v1034
  %v1051 = vpack.c.b16 %v1037, %v1036
  %v1052 = vpack.c.b16 %v1039, %v1038
  %v1053 = vpack.c.b16 %v1041, %v1040
  %v1054 = vpack.c.b16 %v1043, %v1042
  %v1055 = vpack.c.b16 %v1045, %v1044
  %v1056 = vpack.c.b16 %v1047, %v1046
  %v1057 = vpack.c.b16 %v1049, %v1048
  %1066 = vmatpush.bf16.msra.mxu0 %v1057
  %1067 = vmatpush.bf16.msra.mxu0 %v1056
  %1068 = vmatpush.bf16.msra.mxu0 %v1055
  %1069 = vmatpush.bf16.msra.mxu0 %v1054
  %1070 = vmatpush.bf16.msra.mxu0 %v1053
  %1071 = vmatpush.bf16.msra.mxu0 %v1052
  %1072 = vmatpush.bf16.msra.mxu0 %v1051
  %1073 = vmatpush.bf16.msra.mxu0 %v1050
  %1074 = vmatmul.bf16.gmra.mxu0 %v1001
  %v1075 = vpop.f32.mrf.mxu0
  %v1076 = vadd.f32 0.0, %v1075
  %v1077 = vpop.f32.mrf.mxu0
  %1078 = vdwg.mxu0
  %s1079 = scalar_lea.vmem [#allocation3], 32
  %v1080 = vld [vmem:[%s1079] sm:$0xff]
  %v1081 = vadd.f32 %v1080, %v1076
  %v1082 = vtanh.pop %v1081
  %1083 = vst [vmem:[#allocation4] sm:$0xff] %v1082
  %v1084 = vld [vmem:[#allocation4] sm:$0xff]
  %v1085 = vpack.c.bf16 %v1084, %v1084
  %v1086 = vld [vmem:[%s2] sm:$0xf]
  %v1087 = vld [vmem:[%s2 + $0x4] sm:$0xf]
  %v1088 = vld [vmem:[%s2 + $0x8] sm:$0xf]
  %v1089 = vld [vmem:[%s2 + $0xc] sm:$0xf]
  %v1090 = vld [vmem:[%s2 + $0x10] sm:$0xf]
  %v1091 = vld [vmem:[%s2 + $0x14] sm:$0xf]
  %v1092 = vld [vmem:[%s2 + $0x18] sm:$0xf]
  %v1093 = vld [vmem:[%s2 + $0x1c] sm:$0xf]
  %v1094 = vld [vmem:[%s2 + $0x20] sm:$0xf]
  %v1095 = vld [vmem:[%s2 + $0x24] sm:$0xf]
  %v1096 = vld [vmem:[%s2 + $0x28] sm:$0xf]
  %v1097 = vld [vmem:[%s2 + $0x2c] sm:$0xf]
  %v1098 = vld [vmem:[%s2 + $0x30] sm:$0xf]
  %v1099 = vld [vmem:[%s2 + $0x34] sm:$0xf]
  %v1100 = vld [vmem:[%s2 + $0x38] sm:$0xf]
  %v1101 = vld [vmem:[%s2 + $0x3c] sm:$0xf]
  %v1118 = vunpack.c.l.b16 %v1086
  %v1119 = vunpack.c.l.b16 %v1087
  %v1120 = vunpack.c.l.b16 %v1088
  %v1121 = vunpack.c.l.b16 %v1089
  %v1122 = vunpack.c.l.b16 %v1090
  %v1123 = vunpack.c.l.b16 %v1091
  %v1124 = vunpack.c.l.b16 %v1092
  %v1125 = vunpack.c.l.b16 %v1093
  %v1126 = vunpack.c.l.b16 %v1094
  %v1127 = vunpack.c.l.b16 %v1095
  %v1128 = vunpack.c.l.b16 %v1096
  %v1129 = vunpack.c.l.b16 %v1097
  %v1130 = vunpack.c.l.b16 %v1098
  %v1131 = vunpack.c.l.b16 %v1099
  %v1132 = vunpack.c.l.b16 %v1100
  %v1133 = vunpack.c.l.b16 %v1101
  %v1134 = vpack.c.b16 %v1119, %v1118
  %v1135 = vpack.c.b16 %v1121, %v1120
  %v1136 = vpack.c.b16 %v1123, %v1122
  %v1137 = vpack.c.b16 %v1125, %v1124
  %v1138 = vpack.c.b16 %v1127, %v1126
  %v1139 = vpack.c.b16 %v1129, %v1128
  %v1140 = vpack.c.b16 %v1131, %v1130
  %v1141 = vpack.c.b16 %v1133, %v1132
  %1150 = vmatpush.bf16.msra.mxu0 %v1141
  %1151 = vmatpush.bf16.msra.mxu0 %v1140
  %1152 = vmatpush.bf16.msra.mxu0 %v1139
  %1153 = vmatpush.bf16.msra.mxu0 %v1138
  %1154 = vmatpush.bf16.msra.mxu0 %v1137
  %1155 = vmatpush.bf16.msra.mxu0 %v1136
  %1156 = vmatpush.bf16.msra.mxu0 %v1135
  %1157 = vmatpush.bf16.msra.mxu0 %v1134
  %1158 = vmatmul.bf16.gmra.mxu0 %v1085
  %v1159 = vpop.f32.mrf.mxu0
  %v1160 = vadd.f32 0.0, %v1159
  %v1161 = vpop.f32.mrf.mxu0
  %1162 = vdwg.mxu0
  %s1163 = scalar_lea.vmem [#allocation3], 40
  %v1164 = vld [vmem:[%s1163] sm:$0xff]
  %v1165 = vadd.f32 %v1164, %v1160
  %v1166 = vtanh.pop %v1165
  %1167 = vst [vmem:[#allocation4] sm:$0xff] %v1166
  %v1168 = vld [vmem:[#allocation4] sm:$0xff]
  %v1169 = vpack.c.bf16 %v1168, %v1168
  %v1170 = vld [vmem:[%s2] sm:$0xf]
  %v1171 = vld [vmem:[%s2 + $0x4] sm:$0xf]
  %v1172 = vld [vmem:[%s2 + $0x8] sm:$0xf]
  %v1173 = vld [vmem:[%s2 + $0xc] sm:$0xf]
  %v1174 = vld [vmem:[%s2 + $0x10] sm:$0xf]
  %v1175 = vld [vmem:[%s2 + $0x14] sm:$0xf]
  %v1176 = vld [vmem:[%s2 + $0x18] sm:$0xf]
  %v1177 = vld [vmem:[%s2 + $0x1c] sm:$0xf]
  %v1178 = vld [vmem:[%s2 + $0x20] sm:$0xf]
  %v1179 = vld [vmem:[%s2 + $0x24] sm:$0xf]
  %v1180 = vld [vmem:[%s2 + $0x28] sm:$0xf]
  %v1181 = vld [vmem:[%s2 + $0x2c] sm:$0xf]
  %v1182 = vld [vmem:[%s2 + $0x30] sm:$0xf]
  %v1183 = vld [vmem:[%s2 + $0x34] sm:$0xf]
  %v1184 = vld [vmem:[%s2 + $0x38] sm:$0xf]
  %v1185 = vld [vmem:[%s2 + $0x3c] sm:$0xf]
  %v1202 = vunpack.c.l.b16 %v1170
  %v1203 = vunpack.c.l.b16 %v1171
  %v1204 = vunpack.c.l.b16 %v1172
  %v1205 = vunpack.c.l.b16 %v1173
  %v1206 = vunpack.c.l.b16 %v1174
  %v1207 = vunpack.c.l.b16 %v1175
  %v1208 = vunpack.c.l.b16 %v1176
  %v1209 = vunpack.c.l.b16 %v1177
  %v1210 = vunpack.c.l.b16 %v1178
  %v1211 = vunpack.c.l.b16 %v1179
  %v1212 = vunpack.c.l.b16 %v1180
  %v1213 = vunpack.c.l.b16 %v1181
  %v1214 = vunpack.c.l.b16 %v1182
  %v1215 = vunpack.c.l.b16 %v1183
  %v1216 = vunpack.c.l.b16 %v1184
  %v1217 = vunpack.c.l.b16 %v1185
  %v1218 = vpack.c.b16 %v1203, %v1202
  %v1219 = vpack.c.b16 %v1205, %v1204
  %v1220 = vpack.c.b16 %v1207, %v1206
  %v1221 = vpack.c.b16 %v1209, %v1208
  %v1222 = vpack.c.b16 %v1211, %v1210
  %v1223 = vpack.c.b16 %v1213, %v1212
  %v1224 = vpack.c.b16 %v1215, %v1214
  %v1225 = vpack.c.b16 %v1217, %v1216
  %1234 = vmatpush.bf16.msra.mxu0 %v1225
  %1235 = vmatpush.bf16.msra.mxu0 %v1224
  %1236 = vmatpush.bf16.msra.mxu0 %v1223
  %1237 = vmatpush.bf16.msra.mxu0 %v1222
  %1238 = vmatpush.bf16.msra.mxu0 %v1221
  %1239 = vmatpush.bf16.msra.mxu0 %v1220
  %1240 = vmatpush.bf16.msra.mxu0 %v1219
  %1241 = vmatpush.bf16.msra.mxu0 %v1218
  %1242 = vmatmul.bf16.gmra.mxu0 %v1169
  %v1243 = vpop.f32.mrf.mxu0
  %v1244 = vadd.f32 0.0, %v1243
  %v1245 = vpop.f32.mrf.mxu0
  %1246 = vdwg.mxu0
  %s1247 = scalar_lea.vmem [#allocation3], 48
  %v1248 = vld [vmem:[%s1247] sm:$0xff]
  %v1249 = vadd.f32 %v1248, %v1244
  %v1250 = vtanh.pop %v1249
  %1251 = vst [vmem:[#allocation4] sm:$0xff] %v1250
  %v1252 = vld [vmem:[#allocation4] sm:$0xff]
  %v1253 = vpack.c.bf16 %v1252, %v1252
  %v1254 = vld [vmem:[%s2] sm:$0xf]
  %v1255 = vld [vmem:[%s2 + $0x4] sm:$0xf]
  %v1256 = vld [vmem:[%s2 + $0x8] sm:$0xf]
  %v1257 = vld [vmem:[%s2 + $0xc] sm:$0xf]
  %v1258 = vld [vmem:[%s2 + $0x10] sm:$0xf]
  %v1259 = vld [vmem:[%s2 + $0x14] sm:$0xf]
  %v1260 = vld [vmem:[%s2 + $0x18] sm:$0xf]
  %v1261 = vld [vmem:[%s2 + $0x1c] sm:$0xf]
  %v1262 = vld [vmem:[%s2 + $0x20] sm:$0xf]
  %v1263 = vld [vmem:[%s2 + $0x24] sm:$0xf]
  %v1264 = vld [vmem:[%s2 + $0x28] sm:$0xf]
  %v1265 = vld [vmem:[%s2 + $0x2c] sm:$0xf]
  %v1266 = vld [vmem:[%s2 + $0x30] sm:$0xf]
  %v1267 = vld [vmem:[%s2 + $0x34] sm:$0xf]
  %v1268 = vld [vmem:[%s2 + $0x38] sm:$0xf]
  %v1269 = vld [vmem:[%s2 + $0x3c] sm:$0xf]
  %v1286 = vunpack.c.l.b16 %v1254
  %v1287 = vunpack.c.l.b16 %v1255
  %v1288 = vunpack.c.l.b16 %v1256
  %v1289 = vunpack.c.l.b16 %v1257
  %v1290 = vunpack.c.l.b16 %v1258
  %v1291 = vunpack.c.l.b16 %v1259
  %v1292 = vunpack.c.l.b16 %v1260
  %v1293 = vunpack.c.l.b16 %v1261
  %v1294 = vunpack.c.l.b16 %v1262
  %v1295 = vunpack.c.l.b16 %v1263
  %v1296 = vunpack.c.l.b16 %v1264
  %v1297 = vunpack.c.l.b16 %v1265
  %v1298 = vunpack.c.l.b16 %v1266
  %v1299 = vunpack.c.l.b16 %v1267
  %v1300 = vunpack.c.l.b16 %v1268
  %v1301 = vunpack.c.l.b16 %v1269
  %v1302 = vpack.c.b16 %v1287, %v1286
  %v1303 = vpack.c.b16 %v1289, %v1288
  %v1304 = vpack.c.b16 %v1291, %v1290
  %v1305 = vpack.c.b16 %v1293, %v1292
  %v1306 = vpack.c.b16 %v1295, %v1294
  %v1307 = vpack.c.b16 %v1297, %v1296
  %v1308 = vpack.c.b16 %v1299, %v1298
  %v1309 = vpack.c.b16 %v1301, %v1300
  %1318 = vmatpush.bf16.msra.mxu0 %v1309
  %1319 = vmatpush.bf16.msra.mxu0 %v1308
  %1320 = vmatpush.bf16.msra.mxu0 %v1307
  %1321 = vmatpush.bf16.msra.mxu0 %v1306
  %1322 = vmatpush.bf16.msra.mxu0 %v1305
  %1323 = vmatpush.bf16.msra.mxu0 %v1304
  %1324 = vmatpush.bf16.msra.mxu0 %v1303
  %1325 = vmatpush.bf16.msra.mxu0 %v1302
  %1326 = vmatmul.bf16.gmra.mxu0 %v1253
  %v1327 = vpop.f32.mrf.mxu0
  %v1328 = vadd.f32 0.0, %v1327
  %v1329 = vpop.f32.mrf.mxu0
  %1330 = vdwg.mxu0
  %s1331 = scalar_lea.vmem [#allocation3], 56
  %v1332 = vld [vmem:[%s1331] sm:$0xff]
  %v1333 = vadd.f32 %v1332, %v1328
  %v1334 = vtanh.pop %v1333
  %1335 = vst [vmem:[#allocation4] sm:$0xff] %v1334
  %v1336 = vld [vmem:[#allocation4] sm:$0xff]
  %s1337 = scalar_lea.vmem %s5, 8
  %1338 = vst [vmem:[%s1337] sm:$0xff] %v1336
  // Predicated region
  $region22: #{encoder_forward.1} parent=0 // pred_check
    _
  $region23: #{encoder_forward.1} parent=0 // pred_check_branch
    %1340 = sbr.rel (0) target = $region25
  $region24: #{encoder_forward.1} parent=0 // pred_region
    _
  $region25: #{encoder_forward.1} parent=0 // pred_fallthru
    _
  // Predicated region
  $region26: #{encoder_forward.1} parent=0 // pred_check
    _
  $region27: #{encoder_forward.1} parent=0 // pred_check_branch
    %1342 = sbr.rel (0) target = $region29
  $region28: #{encoder_forward.1} parent=0 // pred_region
    _
  $region29: #{encoder_forward.1} parent=0 // pred_fallthru
    _

</llo_original>
